<compile_context>
chip_gen: v6e
topology: v6e:2x2x1
jax: 0.10.0
libtpu: 0.0.40
codegen_flags: <defaults>
</compile_context>

<pallas_src>
import numpy as np
import jax
import jax.numpy as jnp
from jax import lax
from jax.experimental import pallas as pl
from jax.experimental.pallas import tpu as pltpu

_EPS = 1e-5


def _round_up(v, m):
    return (v + m - 1) // m * m


# ---------------------------------------------------------------------------
# Fused BN + ReLU + Conv3x3 + nearest x2 upsample + residual add
# ---------------------------------------------------------------------------
def _make_kernel(offsets, lout, n_groups, gwp, g4w, conv_dtype):
    def kernel(x_ref, res_ref, mask_ref, scale_ref, shift_ref, wmat_ref,
               bias_ref, dup_ref, o_ref):
        # BatchNorm + ReLU on the lane-dense (cin, L) block; the mask restores the
        # zero-padding ring (and the flat tail) to exactly 0 so the 3x3 taps see the
        # same zero padding the PyTorch conv would.
        a = jnp.maximum(x_ref[0] * scale_ref[...] + shift_ref[...], 0.0) * mask_ref[...]
        a = a.astype(conv_dtype)                 # bf16 operands, f32 accumulation

        # 3x3 conv as ONE im2col matmul: (cout, 9*cin) @ (9*cin, Lout) on the MXU.
        # The nine taps are static lane-shifted views of the same flat block (XLU
        # rotates that run as filler under the matmul).
        patches = jnp.concatenate([a[:, off:off + lout] for off in offsets], axis=0)
        acc = (jnp.dot(wmat_ref[...], patches, preferred_element_type=jnp.float32)
               + bias_ref[...])                  # (cout, Lout) f32 — stays in vregs
        acc = acc.astype(conv_dtype)             # bf16 feed for the 0/1 dup matmul

        # Fused nearest-x2 upsample (both axes) + residual add.  dup_ref is a
        # block-diagonal 0/1 matrix (G*Wp, G*4W) whose columns are laid out exactly as
        # the final output slab [z_h, z_h, z_{h+1}, z_{h+1}, ...]: it drops the Wp-W
        # wrap columns, duplicates every valid column (W upsample) and duplicates the
        # whole row (H upsample).  One lane-dense, 128-aligned (cout, G*4W) store per
        # group, residual added in the same pass.
        for g in range(n_groups):
            slab = acc[:, g * gwp:(g + 1) * gwp]                       # (cout, G*Wp)
            z = jnp.dot(slab, dup_ref[...], preferred_element_type=jnp.float32)
            o_ref[0, :, g * g4w:(g + 1) * g4w] = (
                z + res_ref[0, :, g * g4w:(g + 1) * g4w])

    return kernel


def hourglass2d_up_forward(x, residual, params, *, conv_dtype=jnp.bfloat16):
    """x: (N, Cin, H, W) f32 NCHW; residual: (N, Cout, 2H, 2W) f32.  Returns (N, Cout, 2H, 2W)."""
    N, cin, H, W = x.shape
    cout = params['w'].shape[0]
    assert residual.shape == (N, cout, 2 * H, 2 * W)

    Hp, Wp = H + 2, W + 2
    Lout = H * Wp                        # conv output kept in padded-width row layout
    L = _round_up(Hp * Wp + 2, 128)      # flat padded length (+slack keeps taps in-bounds)
    OHW = 4 * H * W                      # flat upsampled output length (lane-dense)
    assert Lout - 1 + 2 * Wp + 2 < L     # max 3x3 tap index stays inside the block

    # Output store grouping: G conv rows per store so each store is >= 128 lanes wide
    # (reduced to a divisor of H so every group is full).
    G = max(1, -(-128 // (4 * W)))
    while H % G:
        G -= 1
    n_groups = H // G
    gwp, g4w = G * Wp, G * 4 * W

    # --- train-mode BatchNorm batch statistics (one fused XLA pass over x) ----------
    mean = jnp.mean(x, axis=(0, 2, 3))
    var = jnp.var(x, axis=(0, 2, 3))
    scale = (params['gamma'] * lax.rsqrt(var + _EPS)).reshape(cin, 1)
    shift = params['beta'].reshape(cin, 1) - mean.reshape(cin, 1) * scale

    # --- zero-pad spatially, flatten rows: each 3x3 tap = one contiguous lane slice --
    xp = jnp.pad(x, ((0, 0), (0, 0), (1, 1), (1, 1)))
    x_flat = jnp.pad(xp.reshape(N, cin, Hp * Wp),
                     ((0, 0), (0, 0), (0, L - Hp * Wp)))
    res_flat = residual.reshape(N, cout, OHW)           # free reshape (contiguous)

    # --- host-built constants --------------------------------------------------------
    m2 = np.zeros((Hp, Wp), np.float32)
    m2[1:H + 1, 1:W + 1] = 1.0
    mask = np.zeros((1, L), np.float32)
    mask[0, :Hp * Wp] = m2.reshape(-1)
    mask = jnp.asarray(mask)

    # conv weights rearranged to (cout, 9*cin), tap-major / channel-minor (matches patches)
    wmat = jnp.transpose(params['w'], (0, 2, 3, 1)).reshape(cout, 9 * cin).astype(conv_dtype)
    bias = params['b'].reshape(cout, 1).astype(jnp.float32)

    # Block-diagonal nearest-upsample matrix (G*Wp, G*4W): for every valid input column
    # it has exactly four 1s laid out as the final output slab [z_h, z_h, z_{h+1}, ...]
    # -> a pure copy, so bf16 operands are exact on the matrix itself.
    dup = np.zeros((gwp, g4w), np.float32)
    for r in range(G):
        for wi in range(W):
            src = r * Wp + wi
            base = r * 4 * W
            dup[src, base + 2 * wi] = 1.0
            dup[src, base + 2 * wi + 1] = 1.0
            dup[src, base + 2 * W + 2 * wi] = 1.0
            dup[src, base + 2 * W + 2 * wi + 1] = 1.0
    dup = jnp.asarray(dup, dtype=conv_dtype)

    offsets = tuple(kh * Wp + kw for kh in range(3) for kw in range(3))
    kernel = _make_kernel(offsets, Lout, n_groups, gwp, g4w, conv_dtype)

    # TODO(synk): for large H*W add a row-tiled "parallel" grid axis (2-row input halo)
    # and/or pl.Buffered(3) on the residual/out specs so double-buffered blocks fit
    # v7x's 64 MiB VMEM and hide the residual+output HBM traffic; at these test sizes a
    # whole image per grid step is tiny and fits comfortably on every generation.
    out_flat = pl.pallas_call(
        kernel,
        grid=(N,),
        in_specs=[
            pl.BlockSpec((1, cin, L), lambda n: (n, 0, 0)),        # x (padded, flat)
            pl.BlockSpec((1, cout, OHW), lambda n: (n, 0, 0)),     # residual (flat)
            pl.BlockSpec((1, L), lambda n: (0, 0)),                # interior mask
            pl.BlockSpec((cin, 1), lambda n: (0, 0)),              # BN scale
            pl.BlockSpec((cin, 1), lambda n: (0, 0)),              # BN shift
            pl.BlockSpec((cout, 9 * cin), lambda n: (0, 0)),       # conv weights (bf16)
            pl.BlockSpec((cout, 1), lambda n: (0, 0)),             # conv bias (f32)
            pl.BlockSpec((gwp, g4w), lambda n: (0, 0)),            # upsample/dup matrix
        ],
        out_specs=pl.BlockSpec((1, cout, OHW), lambda n: (n, 0, 0)),
        out_shape=jax.ShapeDtypeStruct((N, cout, OHW), jnp.float32),
        compiler_params=pltpu.CompilerParams(
            dimension_semantics=("parallel",),
            vmem_limit_bytes=32 * 1024 * 1024),
    )(x_flat, res_flat, mask, scale, shift, wmat, bias, dup)

    # free reshape back to NCHW: flat index is (2h+dh)*2W + ow, i.e. already row-major
    return out_flat.reshape(N, cout, 2 * H, 2 * W)


# ---------------------------------------------------------------------------
# Pure-JAX reference (mirrors the PyTorch module, train-mode BN)
# ---------------------------------------------------------------------------
def ref_forward(x, residual, params):
    mean = jnp.mean(x, axis=(0, 2, 3), keepdims=True)
    var = jnp.var(x, axis=(0, 2, 3), keepdims=True)
    g = params['gamma'].reshape(1, -1, 1, 1)
    b = params['beta'].reshape(1, -1, 1, 1)
    a = jnp.maximum((x - mean) * g * lax.rsqrt(var + _EPS) + b, 0.0)
    y = lax.conv_general_dilated(
        a, params['w'], window_strides=(1, 1), padding=((1, 1), (1, 1)),
        dimension_numbers=('NCHW', 'OIHW', 'NCHW'),
        precision=lax.Precision.HIGHEST)
    y = y + params['b'].reshape(1, -1, 1, 1)
    y = jnp.repeat(jnp.repeat(y, 2, axis=2), 2, axis=3)   # nearest x2
    return y + residual


if __name__ == "__main__":
    N, cin, cout, H, W = 2, 16, 24, 16, 16

    key = jax.random.PRNGKey(0)
    k1, k2, k3, k4, k5, k6 = jax.random.split(key, 6)
    x = jax.random.normal(k1, (N, cin, H, W), jnp.float32)            # PyTorch NCHW
    residual = jax.random.normal(k2, (N, cout, 2 * H, 2 * W), jnp.float32)
    params = {
        'gamma': 1.0 + 0.1 * jax.random.normal(k3, (cin,), jnp.float32),
        'beta': 0.1 * jax.random.normal(k4, (cin,), jnp.float32),
        'w': jax.random.normal(k5, (cout, cin, 3, 3), jnp.float32) / np.sqrt(9.0 * cin),
        'b': 0.05 * jax.random.normal(k6, (cout,), jnp.float32),
    }

    fwd = jax.jit(hourglass2d_up_forward)
    out = jax.block_until_ready(fwd(x, residual, params))             # (N, cout, 2H, 2W)

    ref = ref_forward(x, residual, params)
    # bf16 conv operands with f32 accumulation + one bf16 rounding of the conv output
    # before the (exact 0/1) upsample matmul -> slightly looser tolerance than pure f32
    np.testing.assert_allclose(np.asarray(out), np.asarray(ref), rtol=2e-2, atol=3e-2)
    assert out.shape == (N, cout, 2 * H, 2 * W)
    print("KERNEL_OK")
</pallas_src>

<mosaic_0001>
module attributes {stable_mosaic.version = 11 : i64} {
  func.func @kernel(%arg0: i32, %arg1: memref<1x16x384xf32, #tpu.memory_space<vmem>>, %arg2: memref<1x24x1024xf32, #tpu.memory_space<vmem>>, %arg3: memref<1x384xf32, #tpu.memory_space<vmem>>, %arg4: memref<16x1xf32, #tpu.memory_space<vmem>>, %arg5: memref<16x1xf32, #tpu.memory_space<vmem>>, %arg6: memref<24x144xbf16, #tpu.memory_space<vmem>>, %arg7: memref<24x1xf32, #tpu.memory_space<vmem>>, %arg8: memref<36x128xbf16, #tpu.memory_space<vmem>>, %arg9: memref<1x24x1024xf32, #tpu.memory_space<vmem>>) attributes {dimension_semantics = [#tpu.dimension_semantics<parallel>], iteration_bounds = array<i64: 2>, scalar_prefetch = 0 : i64, scratch_operands = 0 : i64, tpu.core_type = #tpu.core_type<tc>, window_params = [{transform_indices = @transform_0, window_bounds = array<i64: 1, 16, 384>}, {transform_indices = @transform_1, window_bounds = array<i64: 1, 24, 1024>}, {pipeline_mode = #tpu.pipeline_mode<synchronous>, transform_indices = @transform_2, window_bounds = array<i64: 1, 384>}, {pipeline_mode = #tpu.pipeline_mode<synchronous>, transform_indices = @transform_3, window_bounds = array<i64: 16, 1>}, {pipeline_mode = #tpu.pipeline_mode<synchronous>, transform_indices = @transform_4, window_bounds = array<i64: 16, 1>}, {pipeline_mode = #tpu.pipeline_mode<synchronous>, transform_indices = @transform_5, window_bounds = array<i64: 24, 144>}, {pipeline_mode = #tpu.pipeline_mode<synchronous>, transform_indices = @transform_6, window_bounds = array<i64: 24, 1>}, {pipeline_mode = #tpu.pipeline_mode<synchronous>, transform_indices = @transform_7, window_bounds = array<i64: 36, 128>}, {transform_indices = @transform_8, window_bounds = array<i64: 1, 24, 1024>}]} {
    %c0 = arith.constant 0 : index
    %c0_0 = arith.constant 0 : index
    %c0_1 = arith.constant 0 : index
    %0 = vector.load %arg1[%c0, %c0_0, %c0_1] : memref<1x16x384xf32, #tpu.memory_space<vmem>>, vector<1x16x384xf32>
    %1 = vector.shape_cast %0 : vector<1x16x384xf32> to vector<16x384xf32>
    %c0_2 = arith.constant 0 : index
    %c0_3 = arith.constant 0 : index
    %2 = vector.load %arg4[%c0_2, %c0_3] : memref<16x1xf32, #tpu.memory_space<vmem>>, vector<16x1xf32>
    %3 = vector.broadcast %2 : vector<16x1xf32> to vector<16x384xf32>
    %4 = arith.mulf %1, %3 : vector<16x384xf32>
    %c0_4 = arith.constant 0 : index
    %c0_5 = arith.constant 0 : index
    %5 = vector.load %arg5[%c0_4, %c0_5] : memref<16x1xf32, #tpu.memory_space<vmem>>, vector<16x1xf32>
    %6 = vector.broadcast %5 : vector<16x1xf32> to vector<16x384xf32>
    %7 = arith.addf %4, %6 : vector<16x384xf32>
    %cst = arith.constant 0.000000e+00 : f32
    %8 = vector.broadcast %cst : f32 to vector<16x384xf32>
    %9 = arith.maximumf %7, %8 : vector<16x384xf32>
    %c0_6 = arith.constant 0 : index
    %c0_7 = arith.constant 0 : index
    %10 = vector.load %arg3[%c0_6, %c0_7] : memref<1x384xf32, #tpu.memory_space<vmem>>, vector<1x384xf32>
    %11 = vector.broadcast %10 : vector<1x384xf32> to vector<16x384xf32>
    %12 = arith.mulf %9, %11 : vector<16x384xf32>
    %13 = arith.truncf %12 : vector<16x384xf32> to vector<16x384xbf16>
    %14 = vector.extract_strided_slice %13 {offsets = [0, 0], sizes = [16, 288], strides = [1, 1]} : vector<16x384xbf16> to vector<16x288xbf16>
    %15 = vector.extract_strided_slice %13 {offsets = [0, 1], sizes = [16, 288], strides = [1, 1]} : vector<16x384xbf16> to vector<16x288xbf16>
    %16 = vector.extract_strided_slice %13 {offsets = [0, 2], sizes = [16, 288], strides = [1, 1]} : vector<16x384xbf16> to vector<16x288xbf16>
    %17 = vector.extract_strided_slice %13 {offsets = [0, 18], sizes = [16, 288], strides = [1, 1]} : vector<16x384xbf16> to vector<16x288xbf16>
    %18 = vector.extract_strided_slice %13 {offsets = [0, 19], sizes = [16, 288], strides = [1, 1]} : vector<16x384xbf16> to vector<16x288xbf16>
    %19 = vector.extract_strided_slice %13 {offsets = [0, 20], sizes = [16, 288], strides = [1, 1]} : vector<16x384xbf16> to vector<16x288xbf16>
    %20 = vector.extract_strided_slice %13 {offsets = [0, 36], sizes = [16, 288], strides = [1, 1]} : vector<16x384xbf16> to vector<16x288xbf16>
    %21 = vector.extract_strided_slice %13 {offsets = [0, 37], sizes = [16, 288], strides = [1, 1]} : vector<16x384xbf16> to vector<16x288xbf16>
    %22 = vector.extract_strided_slice %13 {offsets = [0, 38], sizes = [16, 288], strides = [1, 1]} : vector<16x384xbf16> to vector<16x288xbf16>
    %23 = tpu.concatenate %14, %15, %16, %17, %18, %19, %20, %21, %22 in 0 : vector<16x288xbf16>, vector<16x288xbf16>, vector<16x288xbf16>, vector<16x288xbf16>, vector<16x288xbf16>, vector<16x288xbf16>, vector<16x288xbf16>, vector<16x288xbf16>, vector<16x288xbf16> -> vector<144x288xbf16>
    %c0_8 = arith.constant 0 : index
    %c0_9 = arith.constant 0 : index
    %24 = vector.load %arg6[%c0_8, %c0_9] : memref<24x144xbf16, #tpu.memory_space<vmem>>, vector<24x144xbf16>
    %cst_10 = arith.constant dense<0.000000e+00> : vector<24x288xf32>
    %25 = tpu.matmul %24, %23, %cst_10 {dimension_numbers = #tpu.dot_dimension_numbers<[1], [0], [0], [1], [0, 0, 1, 1], [], []>} : vector<24x144xbf16>, vector<144x288xbf16>, vector<24x288xf32> -> vector<24x288xf32>
    %c0_11 = arith.constant 0 : index
    %c0_12 = arith.constant 0 : index
    %26 = vector.load %arg7[%c0_11, %c0_12] : memref<24x1xf32, #tpu.memory_space<vmem>>, vector<24x1xf32>
    %27 = vector.broadcast %26 : vector<24x1xf32> to vector<24x288xf32>
    %28 = arith.addf %25, %27 : vector<24x288xf32>
    %29 = arith.truncf %28 : vector<24x288xf32> to vector<24x288xbf16>
    %30 = vector.extract_strided_slice %29 {offsets = [0, 0], sizes = [24, 36], strides = [1, 1]} : vector<24x288xbf16> to vector<24x36xbf16>
    %c0_13 = arith.constant 0 : index
    %c0_14 = arith.constant 0 : index
    %31 = vector.load %arg8[%c0_13, %c0_14] : memref<36x128xbf16, #tpu.memory_space<vmem>>, vector<36x128xbf16>
    %cst_15 = arith.constant dense<0.000000e+00> : vector<24x128xf32>
    %32 = tpu.matmul %30, %31, %cst_15 {dimension_numbers = #tpu.dot_dimension_numbers<[1], [0], [0], [1], [0, 0, 1, 1], [], []>} : vector<24x36xbf16>, vector<36x128xbf16>, vector<24x128xf32> -> vector<24x128xf32>
    %c0_16 = arith.constant 0 : index
    %c0_17 = arith.constant 0 : index
    %c0_18 = arith.constant 0 : index
    %33 = vector.load %arg2[%c0_16, %c0_17, %c0_18] : memref<1x24x1024xf32, #tpu.memory_space<vmem>>, vector<1x24x128xf32>
    %34 = vector.shape_cast %33 : vector<1x24x128xf32> to vector<24x128xf32>
    %35 = arith.addf %32, %34 : vector<24x128xf32>
    %c0_19 = arith.constant 0 : index
    %c0_20 = arith.constant 0 : index
    %c0_21 = arith.constant 0 : index
    %36 = vector.load %arg9[%c0_19, %c0_20, %c0_21] : memref<1x24x1024xf32, #tpu.memory_space<vmem>>, vector<1x24x128xf32>
    %37 = vector.shape_cast %36 : vector<1x24x128xf32> to vector<24x128xf32>
    %38 = vector.shape_cast %35 : vector<24x128xf32> to vector<1x24x128xf32>
    tpu.vector_store %arg9[%c0_19, %c0_20, %c0_21], %38 {strides = array<i32>} : memref<1x24x1024xf32, #tpu.memory_space<vmem>>, vector<1x24x128xf32>,
    %39 = vector.extract_strided_slice %29 {offsets = [0, 36], sizes = [24, 36], strides = [1, 1]} : vector<24x288xbf16> to vector<24x36xbf16>
    %c0_22 = arith.constant 0 : index
    %c0_23 = arith.constant 0 : index
    %40 = vector.load %arg8[%c0_22, %c0_23] : memref<36x128xbf16, #tpu.memory_space<vmem>>, vector<36x128xbf16>
    %cst_24 = arith.constant dense<0.000000e+00> : vector<24x128xf32>
    %41 = tpu.matmul %39, %40, %cst_24 {dimension_numbers = #tpu.dot_dimension_numbers<[1], [0], [0], [1], [0, 0, 1, 1], [], []>} : vector<24x36xbf16>, vector<36x128xbf16>, vector<24x128xf32> -> vector<24x128xf32>
    %c0_25 = arith.constant 0 : index
    %c0_26 = arith.constant 0 : index
    %c128 = arith.constant 128 : index
    %42 = vector.load %arg2[%c0_25, %c0_26, %c128] : memref<1x24x1024xf32, #tpu.memory_space<vmem>>, vector<1x24x128xf32>
    %43 = vector.shape_cast %42 : vector<1x24x128xf32> to vector<24x128xf32>
    %44 = arith.addf %41, %43 : vector<24x128xf32>
    %c0_27 = arith.constant 0 : index
    %c0_28 = arith.constant 0 : index
    %c128_29 = arith.constant 128 : index
    %45 = vector.load %arg9[%c0_27, %c0_28, %c128_29] : memref<1x24x1024xf32, #tpu.memory_space<vmem>>, vector<1x24x128xf32>
    %46 = vector.shape_cast %45 : vector<1x24x128xf32> to vector<24x128xf32>
    %47 = vector.shape_cast %44 : vector<24x128xf32> to vector<1x24x128xf32>
    tpu.vector_store %arg9[%c0_27, %c0_28, %c128_29], %47 {strides = array<i32>} : memref<1x24x1024xf32, #tpu.memory_space<vmem>>, vector<1x24x128xf32>,
    %48 = vector.extract_strided_slice %29 {offsets = [0, 72], sizes = [24, 36], strides = [1, 1]} : vector<24x288xbf16> to vector<24x36xbf16>
    %c0_30 = arith.constant 0 : index
    %c0_31 = arith.constant 0 : index
    %49 = vector.load %arg8[%c0_30, %c0_31] : memref<36x128xbf16, #tpu.memory_space<vmem>>, vector<36x128xbf16>
    %cst_32 = arith.constant dense<0.000000e+00> : vector<24x128xf32>
    %50 = tpu.matmul %48, %49, %cst_32 {dimension_numbers = #tpu.dot_dimension_numbers<[1], [0], [0], [1], [0, 0, 1, 1], [], []>} : vector<24x36xbf16>, vector<36x128xbf16>, vector<24x128xf32> -> vector<24x128xf32>
    %c0_33 = arith.constant 0 : index
    %c0_34 = arith.constant 0 : index
    %c256 = arith.constant 256 : index
    %51 = vector.load %arg2[%c0_33, %c0_34, %c256] : memref<1x24x1024xf32, #tpu.memory_space<vmem>>, vector<1x24x128xf32>
    %52 = vector.shape_cast %51 : vector<1x24x128xf32> to vector<24x128xf32>
    %53 = arith.addf %50, %52 : vector<24x128xf32>
    %c0_35 = arith.constant 0 : index
    %c0_36 = arith.constant 0 : index
    %c256_37 = arith.constant 256 : index
    %54 = vector.load %arg9[%c0_35, %c0_36, %c256_37] : memref<1x24x1024xf32, #tpu.memory_space<vmem>>, vector<1x24x128xf32>
    %55 = vector.shape_cast %54 : vector<1x24x128xf32> to vector<24x128xf32>
    %56 = vector.shape_cast %53 : vector<24x128xf32> to vector<1x24x128xf32>
    tpu.vector_store %arg9[%c0_35, %c0_36, %c256_37], %56 {strides = array<i32>} : memref<1x24x1024xf32, #tpu.memory_space<vmem>>, vector<1x24x128xf32>,
    %57 = vector.extract_strided_slice %29 {offsets = [0, 108], sizes = [24, 36], strides = [1, 1]} : vector<24x288xbf16> to vector<24x36xbf16>
    %c0_38 = arith.constant 0 : index
    %c0_39 = arith.constant 0 : index
    %58 = vector.load %arg8[%c0_38, %c0_39] : memref<36x128xbf16, #tpu.memory_space<vmem>>, vector<36x128xbf16>
    %cst_40 = arith.constant dense<0.000000e+00> : vector<24x128xf32>
    %59 = tpu.matmul %57, %58, %cst_40 {dimension_numbers = #tpu.dot_dimension_numbers<[1], [0], [0], [1], [0, 0, 1, 1], [], []>} : vector<24x36xbf16>, vector<36x128xbf16>, vector<24x128xf32> -> vector<24x128xf32>
    %c0_41 = arith.constant 0 : index
    %c0_42 = arith.constant 0 : index
    %c384 = arith.constant 384 : index
    %60 = vector.load %arg2[%c0_41, %c0_42, %c384] : memref<1x24x1024xf32, #tpu.memory_space<vmem>>, vector<1x24x128xf32>
    %61 = vector.shape_cast %60 : vector<1x24x128xf32> to vector<24x128xf32>
    %62 = arith.addf %59, %61 : vector<24x128xf32>
    %c0_43 = arith.constant 0 : index
    %c0_44 = arith.constant 0 : index
    %c384_45 = arith.constant 384 : index
    %63 = vector.load %arg9[%c0_43, %c0_44, %c384_45] : memref<1x24x1024xf32, #tpu.memory_space<vmem>>, vector<1x24x128xf32>
    %64 = vector.shape_cast %63 : vector<1x24x128xf32> to vector<24x128xf32>
    %65 = vector.shape_cast %62 : vector<24x128xf32> to vector<1x24x128xf32>
    tpu.vector_store %arg9[%c0_43, %c0_44, %c384_45], %65 {strides = array<i32>} : memref<1x24x1024xf32, #tpu.memory_space<vmem>>, vector<1x24x128xf32>,
    %66 = vector.extract_strided_slice %29 {offsets = [0, 144], sizes = [24, 36], strides = [1, 1]} : vector<24x288xbf16> to vector<24x36xbf16>
    %c0_46 = arith.constant 0 : index
    %c0_47 = arith.constant 0 : index
    %67 = vector.load %arg8[%c0_46, %c0_47] : memref<36x128xbf16, #tpu.memory_space<vmem>>, vector<36x128xbf16>
    %cst_48 = arith.constant dense<0.000000e+00> : vector<24x128xf32>
    %68 = tpu.matmul %66, %67, %cst_48 {dimension_numbers = #tpu.dot_dimension_numbers<[1], [0], [0], [1], [0, 0, 1, 1], [], []>} : vector<24x36xbf16>, vector<36x128xbf16>, vector<24x128xf32> -> vector<24x128xf32>
    %c0_49 = arith.constant 0 : index
    %c0_50 = arith.constant 0 : index
    %c512 = arith.constant 512 : index
    %69 = vector.load %arg2[%c0_49, %c0_50, %c512] : memref<1x24x1024xf32, #tpu.memory_space<vmem>>, vector<1x24x128xf32>
    %70 = vector.shape_cast %69 : vector<1x24x128xf32> to vector<24x128xf32>
    %71 = arith.addf %68, %70 : vector<24x128xf32>
    %c0_51 = arith.constant 0 : index
    %c0_52 = arith.constant 0 : index
    %c512_53 = arith.constant 512 : index
    %72 = vector.load %arg9[%c0_51, %c0_52, %c512_53] : memref<1x24x1024xf32, #tpu.memory_space<vmem>>, vector<1x24x128xf32>
    %73 = vector.shape_cast %72 : vector<1x24x128xf32> to vector<24x128xf32>
    %74 = vector.shape_cast %71 : vector<24x128xf32> to vector<1x24x128xf32>
    tpu.vector_store %arg9[%c0_51, %c0_52, %c512_53], %74 {strides = array<i32>} : memref<1x24x1024xf32, #tpu.memory_space<vmem>>, vector<1x24x128xf32>,
    %75 = vector.extract_strided_slice %29 {offsets = [0, 180], sizes = [24, 36], strides = [1, 1]} : vector<24x288xbf16> to vector<24x36xbf16>
    %c0_54 = arith.constant 0 : index
    %c0_55 = arith.constant 0 : index
    %76 = vector.load %arg8[%c0_54, %c0_55] : memref<36x128xbf16, #tpu.memory_space<vmem>>, vector<36x128xbf16>
    %cst_56 = arith.constant dense<0.000000e+00> : vector<24x128xf32>
    %77 = tpu.matmul %75, %76, %cst_56 {dimension_numbers = #tpu.dot_dimension_numbers<[1], [0], [0], [1], [0, 0, 1, 1], [], []>} : vector<24x36xbf16>, vector<36x128xbf16>, vector<24x128xf32> -> vector<24x128xf32>
    %c0_57 = arith.constant 0 : index
    %c0_58 = arith.constant 0 : index
    %c640 = arith.constant 640 : index
    %78 = vector.load %arg2[%c0_57, %c0_58, %c640] : memref<1x24x1024xf32, #tpu.memory_space<vmem>>, vector<1x24x128xf32>
    %79 = vector.shape_cast %78 : vector<1x24x128xf32> to vector<24x128xf32>
    %80 = arith.addf %77, %79 : vector<24x128xf32>
    %c0_59 = arith.constant 0 : index
    %c0_60 = arith.constant 0 : index
    %c640_61 = arith.constant 640 : index
    %81 = vector.load %arg9[%c0_59, %c0_60, %c640_61] : memref<1x24x1024xf32, #tpu.memory_space<vmem>>, vector<1x24x128xf32>
    %82 = vector.shape_cast %81 : vector<1x24x128xf32> to vector<24x128xf32>
    %83 = vector.shape_cast %80 : vector<24x128xf32> to vector<1x24x128xf32>
    tpu.vector_store %arg9[%c0_59, %c0_60, %c640_61], %83 {strides = array<i32>} : memref<1x24x1024xf32, #tpu.memory_space<vmem>>, vector<1x24x128xf32>,
    %84 = vector.extract_strided_slice %29 {offsets = [0, 216], sizes = [24, 36], strides = [1, 1]} : vector<24x288xbf16> to vector<24x36xbf16>
    %c0_62 = arith.constant 0 : index
    %c0_63 = arith.constant 0 : index
    %85 = vector.load %arg8[%c0_62, %c0_63] : memref<36x128xbf16, #tpu.memory_space<vmem>>, vector<36x128xbf16>
    %cst_64 = arith.constant dense<0.000000e+00> : vector<24x128xf32>
    %86 = tpu.matmul %84, %85, %cst_64 {dimension_numbers = #tpu.dot_dimension_numbers<[1], [0], [0], [1], [0, 0, 1, 1], [], []>} : vector<24x36xbf16>, vector<36x128xbf16>, vector<24x128xf32> -> vector<24x128xf32>
    %c0_65 = arith.constant 0 : index
    %c0_66 = arith.constant 0 : index
    %c768 = arith.constant 768 : index
    %87 = vector.load %arg2[%c0_65, %c0_66, %c768] : memref<1x24x1024xf32, #tpu.memory_space<vmem>>, vector<1x24x128xf32>
    %88 = vector.shape_cast %87 : vector<1x24x128xf32> to vector<24x128xf32>
    %89 = arith.addf %86, %88 : vector<24x128xf32>
    %c0_67 = arith.constant 0 : index
    %c0_68 = arith.constant 0 : index
    %c768_69 = arith.constant 768 : index
    %90 = vector.load %arg9[%c0_67, %c0_68, %c768_69] : memref<1x24x1024xf32, #tpu.memory_space<vmem>>, vector<1x24x128xf32>
    %91 = vector.shape_cast %90 : vector<1x24x128xf32> to vector<24x128xf32>
    %92 = vector.shape_cast %89 : vector<24x128xf32> to vector<1x24x128xf32>
    tpu.vector_store %arg9[%c0_67, %c0_68, %c768_69], %92 {strides = array<i32>} : memref<1x24x1024xf32, #tpu.memory_space<vmem>>, vector<1x24x128xf32>,
    %93 = vector.extract_strided_slice %29 {offsets = [0, 252], sizes = [24, 36], strides = [1, 1]} : vector<24x288xbf16> to vector<24x36xbf16>
    %c0_70 = arith.constant 0 : index
    %c0_71 = arith.constant 0 : index
    %94 = vector.load %arg8[%c0_70, %c0_71] : memref<36x128xbf16, #tpu.memory_space<vmem>>, vector<36x128xbf16>
    %cst_72 = arith.constant dense<0.000000e+00> : vector<24x128xf32>
    %95 = tpu.matmul %93, %94, %cst_72 {dimension_numbers = #tpu.dot_dimension_numbers<[1], [0], [0], [1], [0, 0, 1, 1], [], []>} : vector<24x36xbf16>, vector<36x128xbf16>, vector<24x128xf32> -> vector<24x128xf32>
    %c0_73 = arith.constant 0 : index
    %c0_74 = arith.constant 0 : index
    %c896 = arith.constant 896 : index
    %96 = vector.load %arg2[%c0_73, %c0_74, %c896] : memref<1x24x1024xf32, #tpu.memory_space<vmem>>, vector<1x24x128xf32>
    %97 = vector.shape_cast %96 : vector<1x24x128xf32> to vector<24x128xf32>
    %98 = arith.addf %95, %97 : vector<24x128xf32>
    %c0_75 = arith.constant 0 : index
    %c0_76 = arith.constant 0 : index
    %c896_77 = arith.constant 896 : index
    %99 = vector.load %arg9[%c0_75, %c0_76, %c896_77] : memref<1x24x1024xf32, #tpu.memory_space<vmem>>, vector<1x24x128xf32>
    %100 = vector.shape_cast %99 : vector<1x24x128xf32> to vector<24x128xf32>
    %101 = vector.shape_cast %98 : vector<24x128xf32> to vector<1x24x128xf32>
    tpu.vector_store %arg9[%c0_75, %c0_76, %c896_77], %101 {strides = array<i32>} : memref<1x24x1024xf32, #tpu.memory_space<vmem>>, vector<1x24x128xf32>,
    return
  }
  func.func @transform_0(%arg0: i32) -> (i32, i32, i32) {
    %c0_i32 = arith.constant 0 : i32
    %c0_i32_0 = arith.constant 0 : i32
    %c0_i32_1 = arith.constant 0 : i32
    return %arg0, %c0_i32, %c0_i32_0 : i32, i32, i32
  }
  func.func @transform_1(%arg0: i32) -> (i32, i32, i32) {
    %c0_i32 = arith.constant 0 : i32
    %c0_i32_0 = arith.constant 0 : i32
    %c0_i32_1 = arith.constant 0 : i32
    return %arg0, %c0_i32, %c0_i32_0 : i32, i32, i32
  }
  func.func @transform_2(%arg0: i32) -> (i32, i32) {
    %c0_i32 = arith.constant 0 : i32
    %c0_i32_0 = arith.constant 0 : i32
    %c0_i32_1 = arith.constant 0 : i32
    return %c0_i32, %c0_i32_0 : i32, i32
  }
  func.func @transform_3(%arg0: i32) -> (i32, i32) {
    %c0_i32 = arith.constant 0 : i32
    %c0_i32_0 = arith.constant 0 : i32
    %c0_i32_1 = arith.constant 0 : i32
    return %c0_i32, %c0_i32_0 : i32, i32
  }
  func.func @transform_4(%arg0: i32) -> (i32, i32) {
    %c0_i32 = arith.constant 0 : i32
    %c0_i32_0 = arith.constant 0 : i32
    %c0_i32_1 = arith.constant 0 : i32
    return %c0_i32, %c0_i32_0 : i32, i32
  }
  func.func @transform_5(%arg0: i32) -> (i32, i32) {
    %c0_i32 = arith.constant 0 : i32
    %c0_i32_0 = arith.constant 0 : i32
    %c0_i32_1 = arith.constant 0 : i32
    return %c0_i32, %c0_i32_0 : i32, i32
  }
  func.func @transform_6(%arg0: i32) -> (i32, i32) {
    %c0_i32 = arith.constant 0 : i32
    %c0_i32_0 = arith.constant 0 : i32
    %c0_i32_1 = arith.constant 0 : i32
    return %c0_i32, %c0_i32_0 : i32, i32
  }
  func.func @transform_7(%arg0: i32) -> (i32, i32) {
    %c0_i32 = arith.constant 0 : i32
    %c0_i32_0 = arith.constant 0 : i32
    %c0_i32_1 = arith.constant 0 : i32
    return %c0_i32, %c0_i32_0 : i32, i32
  }
  func.func @transform_8(%arg0: i32) -> (i32, i32, i32) {
    %c0_i32 = arith.constant 0 : i32
    %c0_i32_0 = arith.constant 0 : i32
    %c0_i32_1 = arith.constant 0 : i32
    return %arg0, %c0_i32, %c0_i32_0 : i32, i32, i32
  }
}

</mosaic_0001>

<llo_original>
// kernel: hourglass2d_up_forward.1
$region0: #{hourglass2d_up_forward.1}
  #allocation0 [shape = 'u32[]', space=smem, size = 0x4, offset = 0x4, fixed_abs, tag = 'smem constant byte address 0x4 - core index']
  #allocation1 [shape = 'u32[144,128]{1,0:T(1,128)}', space=vmem, size = 0x12000, scoped, tag = 'internal scratch']
  %s0 = inlined_call_operand.vmem [shape: f32[2,16,384], index: 0, kind: input, shape index: {}]
  %s1 = inlined_call_operand.vmem [shape: f32[2,24,1024], index: 1, kind: input, shape index: {}]
  %s2 = inlined_call_operand.vmem [shape: f32[1,384], index: 2, kind: input, shape index: {}]
  %s3 = inlined_call_operand.vmem [shape: f32[16,1], index: 3, kind: input, shape index: {}]
  %s4 = inlined_call_operand.vmem [shape: f32[16,1], index: 4, kind: input, shape index: {}]
  %s5 = inlined_call_operand.vmem [shape: bf16[24,144], index: 5, kind: input, shape index: {}]
  %s6 = inlined_call_operand.vmem [shape: f32[24,1], index: 6, kind: input, shape index: {}]
  %s7 = inlined_call_operand.vmem [shape: bf16[36,128], index: 7, kind: input, shape index: {}]
  %s8 = inlined_call_operand.vmem [shape: f32[2,24,1024], index: 8, kind: output, shape index: {}]
  %s9 = sld [smem:[#allocation0]]
  $region65: #{hourglass2d_up_forward.1} parent=0
    _
  %s11 = ssub.s32 1, %s9
  %s12 = scalar_select 0, %s11, %s9
  loop: start=0, step=1, limit=4
  $region2: #{hourglass2d_up_forward.1} parent=0 // loop_pre_header
    _
  $region3: #{hourglass2d_up_forward.1} parent=0 // loop_header
    %s14 = sphi 0, %s18
    %p15 = scmp.ge.s32.totalorder %s14, 4
    %s24 = sphi 0, %s26
    %s27 = sphi 0, %s24
    %s28 = sphi 0, %s27
    %s44 = sphi 0, %s28
    %s50 = sphi 0, %s52
    %s53 = sphi 0, %s50
    %s54 = sphi 0, %s53
    %s70 = sphi 0, %s54
    %s74 = sphi 0, %s74
    %s76 = sphi 0, %s74
    %s77 = sphi 0, %s76
    %s91 = sphi 0, %s77
    %s95 = sphi 0, %s95
    %s97 = sphi 0, %s95
    %s98 = sphi 0, %s97
    %s112 = sphi 0, %s98
    %s116 = sphi 0, %s116
    %s118 = sphi 0, %s116
    %s119 = sphi 0, %s118
    %s133 = sphi 0, %s119
    %s137 = sphi 0, %s137
    %s139 = sphi 0, %s137
    %s140 = sphi 0, %s139
    %s154 = sphi 0, %s140
    %s158 = sphi 0, %s158
    %s160 = sphi 0, %s158
    %s161 = sphi 0, %s160
    %s175 = sphi 0, %s161
    %s179 = sphi 0, %s179
    %s181 = sphi 0, %s179
    %s182 = sphi 0, %s181
    %s196 = sphi 0, %s182
    %s202 = sphi 0, %s204
    %s205 = sphi 0, %s202
    %s206 = sphi 0, %s205
    %s222 = sphi 0, %s206
  $region4: #{hourglass2d_up_forward.1} parent=0 // loop_header_branch
    %17 = sbr.rel (%p15) target = $region8
  $region5: #{hourglass2d_up_forward.1} parent=0 // loop_body
    %s19 = ssub.s32 %s14, 1
    %s20 = ssub.s32 %s14, 2
    %s21 = sadd.s32 %s14, 1
    %s22 = ssub.s32 %s14, %s21
    %p23 = scmp.eq.s32.totalorder %s22, 0
    %s25 = sadd.s32 %s24, 1
    %s26 = scalar_select %p23, %s24, %s25
    %p29 = pneg %p23
    %p30 = scmp.eq.s32.totalorder %s14, 1
    %p31 = por %p29, %p30
    %p32 = scmp.ne.s32.totalorder %s24, %s27
    %p33 = scmp.eq.s32.totalorder %s14, 0
    %p34 = por %p32, %p33
    %p35 = scmp.ne.s32.totalorder %s24, %s27
    %p36 = scmp.eq.s32.totalorder %s19, 1
    %p37 = por %p35, %p36
    %p38 = scmp.ne.s32.totalorder %s27, %s28
    %p39 = scmp.eq.s32.totalorder %s19, 0
    %p40 = por %p38, %p39
    %p41 = scmp.ne.s32.totalorder %s27, %s28
    %p42 = scmp.eq.s32.totalorder %s20, 1
    %p43 = por %p41, %p42
    %p45 = scmp.ne.s32.totalorder %s28, %s44
    %p46 = scmp.eq.s32.totalorder %s20, 0
    %p47 = por %p45, %p46
    %s48 = ssub.s32 %s14, %s21
    %p49 = scmp.eq.s32.totalorder %s48, 0
    %s51 = sadd.s32 %s50, 1
    %s52 = scalar_select %p49, %s50, %s51
    %p55 = pneg %p49
    %p56 = scmp.eq.s32.totalorder %s14, 1
    %p57 = por %p55, %p56
    %p58 = scmp.ne.s32.totalorder %s50, %s53
    %p59 = scmp.eq.s32.totalorder %s14, 0
    %p60 = por %p58, %p59
    %p61 = scmp.ne.s32.totalorder %s50, %s53
    %p62 = scmp.eq.s32.totalorder %s19, 1
    %p63 = por %p61, %p62
    %p64 = scmp.ne.s32.totalorder %s53, %s54
    %p65 = scmp.eq.s32.totalorder %s19, 0
    %p66 = por %p64, %p65
    %p67 = scmp.ne.s32.totalorder %s53, %s54
    %p68 = scmp.eq.s32.totalorder %s20, 1
    %p69 = por %p67, %p68
    %p71 = scmp.ne.s32.totalorder %s54, %s70
    %p72 = scmp.eq.s32.totalorder %s20, 0
    %p73 = por %p71, %p72
    %s75 = sadd.s32 %s74, 1
    %p78 = scmp.eq.s32.totalorder %s14, 1
    %p79 = scmp.ne.s32.totalorder %s74, %s76
    %p80 = scmp.eq.s32.totalorder %s14, 0
    %p81 = por %p79, %p80
    %p82 = scmp.ne.s32.totalorder %s74, %s76
    %p83 = scmp.eq.s32.totalorder %s19, 1
    %p84 = por %p82, %p83
    %p85 = scmp.ne.s32.totalorder %s76, %s77
    %p86 = scmp.eq.s32.totalorder %s19, 0
    %p87 = por %p85, %p86
    %p88 = scmp.ne.s32.totalorder %s76, %s77
    %p89 = scmp.eq.s32.totalorder %s20, 1
    %p90 = por %p88, %p89
    %p92 = scmp.ne.s32.totalorder %s77, %s91
    %p93 = scmp.eq.s32.totalorder %s20, 0
    %p94 = por %p92, %p93
    %s96 = sadd.s32 %s95, 1
    %p99 = scmp.eq.s32.totalorder %s14, 1
    %p100 = scmp.ne.s32.totalorder %s95, %s97
    %p101 = scmp.eq.s32.totalorder %s14, 0
    %p102 = por %p100, %p101
    %p103 = scmp.ne.s32.totalorder %s95, %s97
    %p104 = scmp.eq.s32.totalorder %s19, 1
    %p105 = por %p103, %p104
    %p106 = scmp.ne.s32.totalorder %s97, %s98
    %p107 = scmp.eq.s32.totalorder %s19, 0
    %p108 = por %p106, %p107
    %p109 = scmp.ne.s32.totalorder %s97, %s98
    %p110 = scmp.eq.s32.totalorder %s20, 1
    %p111 = por %p109, %p110
    %p113 = scmp.ne.s32.totalorder %s98, %s112
    %p114 = scmp.eq.s32.totalorder %s20, 0
    %p115 = por %p113, %p114
    %s117 = sadd.s32 %s116, 1
    %p120 = scmp.eq.s32.totalorder %s14, 1
    %p121 = scmp.ne.s32.totalorder %s116, %s118
    %p122 = scmp.eq.s32.totalorder %s14, 0
    %p123 = por %p121, %p122
    %p124 = scmp.ne.s32.totalorder %s116, %s118
    %p125 = scmp.eq.s32.totalorder %s19, 1
    %p126 = por %p124, %p125
    %p127 = scmp.ne.s32.totalorder %s118, %s119
    %p128 = scmp.eq.s32.totalorder %s19, 0
    %p129 = por %p127, %p128
    %p130 = scmp.ne.s32.totalorder %s118, %s119
    %p131 = scmp.eq.s32.totalorder %s20, 1
    %p132 = por %p130, %p131
    %p134 = scmp.ne.s32.totalorder %s119, %s133
    %p135 = scmp.eq.s32.totalorder %s20, 0
    %p136 = por %p134, %p135
    %s138 = sadd.s32 %s137, 1
    %p141 = scmp.eq.s32.totalorder %s14, 1
    %p142 = scmp.ne.s32.totalorder %s137, %s139
    %p143 = scmp.eq.s32.totalorder %s14, 0
    %p144 = por %p142, %p143
    %p145 = scmp.ne.s32.totalorder %s137, %s139
    %p146 = scmp.eq.s32.totalorder %s19, 1
    %p147 = por %p145, %p146
    %p148 = scmp.ne.s32.totalorder %s139, %s140
    %p149 = scmp.eq.s32.totalorder %s19, 0
    %p150 = por %p148, %p149
    %p151 = scmp.ne.s32.totalorder %s139, %s140
    %p152 = scmp.eq.s32.totalorder %s20, 1
    %p153 = por %p151, %p152
    %p155 = scmp.ne.s32.totalorder %s140, %s154
    %p156 = scmp.eq.s32.totalorder %s20, 0
    %p157 = por %p155, %p156
    %s159 = sadd.s32 %s158, 1
    %p162 = scmp.eq.s32.totalorder %s14, 1
    %p163 = scmp.ne.s32.totalorder %s158, %s160
    %p164 = scmp.eq.s32.totalorder %s14, 0
    %p165 = por %p163, %p164
    %p166 = scmp.ne.s32.totalorder %s158, %s160
    %p167 = scmp.eq.s32.totalorder %s19, 1
    %p168 = por %p166, %p167
    %p169 = scmp.ne.s32.totalorder %s160, %s161
    %p170 = scmp.eq.s32.totalorder %s19, 0
    %p171 = por %p169, %p170
    %p172 = scmp.ne.s32.totalorder %s160, %s161
    %p173 = scmp.eq.s32.totalorder %s20, 1
    %p174 = por %p172, %p173
    %p176 = scmp.ne.s32.totalorder %s161, %s175
    %p177 = scmp.eq.s32.totalorder %s20, 0
    %p178 = por %p176, %p177
    %s180 = sadd.s32 %s179, 1
    %p183 = scmp.eq.s32.totalorder %s14, 1
    %p184 = scmp.ne.s32.totalorder %s179, %s181
    %p185 = scmp.eq.s32.totalorder %s14, 0
    %p186 = por %p184, %p185
    %p187 = scmp.ne.s32.totalorder %s179, %s181
    %p188 = scmp.eq.s32.totalorder %s19, 1
    %p189 = por %p187, %p188
    %p190 = scmp.ne.s32.totalorder %s181, %s182
    %p191 = scmp.eq.s32.totalorder %s19, 0
    %p192 = por %p190, %p191
    %p193 = scmp.ne.s32.totalorder %s181, %s182
    %p194 = scmp.eq.s32.totalorder %s20, 1
    %p195 = por %p193, %p194
    %p197 = scmp.ne.s32.totalorder %s182, %s196
    %p198 = scmp.eq.s32.totalorder %s20, 0
    %p199 = por %p197, %p198
    %s200 = ssub.s32 %s14, %s21
    %p201 = scmp.eq.s32.totalorder %s200, 0
    %s203 = sadd.s32 %s202, 1
    %s204 = scalar_select %p201, %s202, %s203
    %p207 = pneg %p201
    %p208 = scmp.eq.s32.totalorder %s14, 1
    %p209 = por %p207, %p208
    %p210 = scmp.ne.s32.totalorder %s202, %s205
    %p211 = scmp.eq.s32.totalorder %s14, 0
    %p212 = por %p210, %p211
    %p213 = scmp.ne.s32.totalorder %s202, %s205
    %p214 = scmp.eq.s32.totalorder %s19, 1
    %p215 = por %p213, %p214
    %p216 = scmp.ne.s32.totalorder %s205, %s206
    %p217 = scmp.eq.s32.totalorder %s19, 0
    %p218 = por %p216, %p217
    %p219 = scmp.ne.s32.totalorder %s205, %s206
    %p220 = scmp.eq.s32.totalorder %s20, 1
    %p221 = por %p219, %p220
    %p223 = scmp.ne.s32.totalorder %s206, %s222
    %p224 = scmp.eq.s32.totalorder %s20, 0
    %p225 = por %p223, %p224
    %p226 = scmp.le.s32.totalorder 1, %s14
    %p227 = scmp.lt.s32.totalorder %s14, 3
    %p228 = pnand %p226, %p227
    %p229 = pneg %p228
    // Predicated region
    $region9: #{hourglass2d_up_forward.1} parent=5 // pred_check
      _
    $region10: #{hourglass2d_up_forward.1} parent=5 // pred_check_branch
      %231 = sbr.rel (%p228) target = $region12
    $region11: #{hourglass2d_up_forward.1} parent=5 // pred_region
      %s232 = ssub.s32 %s14, 1
      // Predicated region
      $region13: #{hourglass2d_up_forward.1} parent=11 // pred_check
        %p233 = pneg %p87
      $region14: #{hourglass2d_up_forward.1} parent=11 // pred_check_branch
        %235 = sbr.rel (%p233) target = $region16
      $region15: #{hourglass2d_up_forward.1} parent=11 // pred_region
        _
      $region16: #{hourglass2d_up_forward.1} parent=11 // pred_fallthru
        _
      // Predicated region
      $region17: #{hourglass2d_up_forward.1} parent=11 // pred_check
        %p236 = pneg %p108
      $region18: #{hourglass2d_up_forward.1} parent=11 // pred_check_branch
        %238 = sbr.rel (%p236) target = $region20
      $region19: #{hourglass2d_up_forward.1} parent=11 // pred_region
        _
      $region20: #{hourglass2d_up_forward.1} parent=11 // pred_fallthru
        _
      // Predicated region
      $region21: #{hourglass2d_up_forward.1} parent=11 // pred_check
        %p239 = pneg %p129
      $region22: #{hourglass2d_up_forward.1} parent=11 // pred_check_branch
        %241 = sbr.rel (%p239) target = $region24
      $region23: #{hourglass2d_up_forward.1} parent=11 // pred_region
        _
      $region24: #{hourglass2d_up_forward.1} parent=11 // pred_fallthru
        _
      // Predicated region
      $region25: #{hourglass2d_up_forward.1} parent=11 // pred_check
        %p242 = pneg %p150
      $region26: #{hourglass2d_up_forward.1} parent=11 // pred_check_branch
        %244 = sbr.rel (%p242) target = $region28
      $region27: #{hourglass2d_up_forward.1} parent=11 // pred_region
        _
      $region28: #{hourglass2d_up_forward.1} parent=11 // pred_fallthru
        _
      // Predicated region
      $region29: #{hourglass2d_up_forward.1} parent=11 // pred_check
        %p245 = pneg %p171
      $region30: #{hourglass2d_up_forward.1} parent=11 // pred_check_branch
        %247 = sbr.rel (%p245) target = $region32
      $region31: #{hourglass2d_up_forward.1} parent=11 // pred_region
        _
      $region32: #{hourglass2d_up_forward.1} parent=11 // pred_fallthru
        _
      // Predicated region
      $region33: #{hourglass2d_up_forward.1} parent=11 // pred_check
        %p248 = pneg %p192
      $region34: #{hourglass2d_up_forward.1} parent=11 // pred_check_branch
        %250 = sbr.rel (%p248) target = $region36
      $region35: #{hourglass2d_up_forward.1} parent=11 // pred_region
        _
      $region36: #{hourglass2d_up_forward.1} parent=11 // pred_fallthru
        _
    $region12: #{hourglass2d_up_forward.1} parent=5 // pred_fallthru
      _
    %p251 = scmp.lt.s32.totalorder %s14, 2
    // Predicated region
    $region37: #{hourglass2d_up_forward.1} parent=5 // pred_check
      %p252 = pneg %p251
    $region38: #{hourglass2d_up_forward.1} parent=5 // pred_check_branch
      %254 = sbr.rel (%p252) target = $region40
    $region39: #{hourglass2d_up_forward.1} parent=5 // pred_region
      // Predicated region
      $region41: #{hourglass2d_up_forward.1} parent=39 // pred_check
        %p255 = pneg %p34
      $region42: #{hourglass2d_up_forward.1} parent=39 // pred_check_branch
        %257 = sbr.rel (%p255) target = $region44
      $region43: #{hourglass2d_up_forward.1} parent=39 // pred_region
        %p258 = scmp.lt.s32.totalorder %s14, 1
        %s259 = scalar_select %p258, %s14, 1
        %s260 = smul.addr %s259, 6
        %s261 = smul.addr %s260, 8
        %s262 = scalar_lea.vmem %s0, %s261
      $region44: #{hourglass2d_up_forward.1} parent=39 // pred_fallthru
        _
      // Predicated region
      $region45: #{hourglass2d_up_forward.1} parent=39 // pred_check
        %p263 = pneg %p60
      $region46: #{hourglass2d_up_forward.1} parent=39 // pred_check_branch
        %265 = sbr.rel (%p263) target = $region48
      $region47: #{hourglass2d_up_forward.1} parent=39 // pred_region
        %p266 = scmp.lt.s32.totalorder %s14, 1
        %s267 = scalar_select %p266, %s14, 1
        %s268 = smul.addr %s267, 24
        %s269 = smul.addr %s268, 8
        %s270 = scalar_lea.vmem %s1, %s269
      $region48: #{hourglass2d_up_forward.1} parent=39 // pred_fallthru
        _
    $region40: #{hourglass2d_up_forward.1} parent=5 // pred_fallthru
      _
    %p271 = scmp.le.s32.totalorder 1, %s14
    %p272 = scmp.lt.s32.totalorder %s14, 3
    %p273 = pnand %p271, %p272
    %p274 = pneg %p273
    // Predicated region
    $region49: #{hourglass2d_up_forward.1} parent=5 // pred_check
      _
    $region50: #{hourglass2d_up_forward.1} parent=5 // pred_check_branch
      %276 = sbr.rel (%p273) target = $region52
    $region51: #{hourglass2d_up_forward.1} parent=5 // pred_region
      %s277 = ssub.s32 %s14, 1
      %p278 = scmp.lt.s32.totalorder %s19, 1
      %s279 = scalar_select %p278, %s19, 1
      %s280 = smul.addr %s279, 6
      %s281 = smul.addr %s280, 8
      %s282 = scalar_lea.vmem %s0, %s281
      %p283 = pneg %p40
      %p284 = pneg %p37
      %p285 = scmp.lt.s32.totalorder %s19, 1
      %s286 = scalar_select %p285, %s19, 1
      %s287 = smul.addr %s286, 24
      %s288 = smul.addr %s287, 8
      %s289 = scalar_lea.vmem %s1, %s288
      %p290 = pneg %p66
      %p291 = pneg %p63
      %p292 = pneg %p87
      %p293 = pneg %p84
      %p294 = pneg %p108
      %p295 = pneg %p105
      %p296 = pneg %p129
      %p297 = pneg %p126
      %p298 = pneg %p150
      %p299 = pneg %p147
      %p300 = pneg %p171
      %p301 = pneg %p168
      %p302 = pneg %p192
      %p303 = pneg %p189
      %p304 = pneg %p218
      %p305 = pneg %p215
      %p306 = scmp.lt.s32.totalorder %s19, 1
      %s307 = scalar_select %p306, %s19, 1
      %s308 = smul.addr %s307, 24
      %s309 = smul.addr %s308, 8
      %s310 = scalar_lea.vmem %s8, %s309
      %p311 = scmp.lt.s32.totalorder %s19, 1
      %s312 = scalar_select %p311, %s19, 1
      %s313 = smul.addr %s312, 6
      %s314 = smul.addr %s313, 8
      %s315 = scalar_lea.vmem %s0, %s314
      %p316 = scmp.lt.s32.totalorder %s19, 1
      %s317 = scalar_select %p316, %s19, 1
      %s318 = smul.addr %s317, 24
      %s319 = smul.addr %s318, 8
      %s320 = scalar_lea.vmem %s1, %s319
      %p321 = scmp.lt.s32.totalorder %s19, 1
      %s322 = scalar_select %p321, %s19, 1
      %s323 = smul.addr %s322, 24
      %s324 = smul.addr %s323, 8
      %s325 = scalar_lea.vmem %s8, %s324
      %v327 = vld [vmem:[%s315] sm:$0xff]
      %v328 = vld [vmem:[%s315 + $0x8] sm:$0xff]
      %v329 = vld [vmem:[%s315 + $0x10] sm:$0xff]
      %v330 = vld [vmem:[%s315 + $0x18] sm:$0xff]
      %v331 = vld [vmem:[%s315 + $0x20] sm:$0xff]
      %v332 = vld [vmem:[%s315 + $0x28] sm:$0xff]
      %v333 = vld [vmem:[%s3] sm:$0xff]
      %v334 = vld [vmem:[%s3 + $0x8] sm:$0xff]
      %336 = vset.pattern.permute.xlu0 0
      %337 = vperm.xlu0 %336, %v333
      %v338 = vpop.permute.xlu0 %337
      %341 = vset.pattern.permute.xlu0 0
      %342 = vperm.xlu0 %341, %v334
      %v343 = vpop.permute.xlu0 %342
      %v345 = vmul.f32 %v327, %v338
      %v346 = vmul.f32 %v328, %v338
      %v347 = vmul.f32 %v329, %v338
      %v348 = vmul.f32 %v330, %v343
      %v349 = vmul.f32 %v331, %v343
      %v350 = vmul.f32 %v332, %v343
      %v351 = vld [vmem:[%s4] sm:$0xff]
      %v352 = vld [vmem:[%s4 + $0x8] sm:$0xff]
      %354 = vset.pattern.permute.xlu0 0
      %355 = vperm.xlu0 %354, %v351
      %v356 = vpop.permute.xlu0 %355
      %359 = vset.pattern.permute.xlu0 0
      %360 = vperm.xlu0 %359, %v352
      %v361 = vpop.permute.xlu0 %360
      %v363 = vadd.f32 %v345, %v356
      %v364 = vadd.f32 %v346, %v356
      %v365 = vadd.f32 %v347, %v356
      %v366 = vadd.f32 %v348, %v361
      %v367 = vadd.f32 %v349, %v361
      %v368 = vadd.f32 %v350, %v361
      %v369 = vmax.f32 %v363, 0.0
      %v370 = vmax.f32 %v364, 0.0
      %v371 = vmax.f32 %v365, 0.0
      %v372 = vmax.f32 %v366, 0.0
      %v373 = vmax.f32 %v367, 0.0
      %v374 = vmax.f32 %v368, 0.0
      %v375 = vld [vmem:[%s2] sm:$0x7]
      %v377 = vlaneseq
      %v378 = vshrl.u32 %v377, 7
      %v379 = vsub.s32 0, %v378
      %v380 = vrot.slane %v375, %v379
      %v381 = vlaneseq
      %v382 = vshrl.u32 %v381, 7
      %v383 = vsub.s32 1, %v382
      %v384 = vrot.slane %v375, %v383
      %v385 = vlaneseq
      %v386 = vshrl.u32 %v385, 7
      %v387 = vsub.s32 2, %v386
      %v388 = vrot.slane %v375, %v387
      %v392 = vmul.f32 %v369, %v380
      %v393 = vmul.f32 %v370, %v384
      %v394 = vmul.f32 %v371, %v388
      %v395 = vmul.f32 %v372, %v380
      %v396 = vmul.f32 %v373, %v384
      %v397 = vmul.f32 %v374, %v388
      %v398 = vpack.c.bf16 %v395, %v392
      %v399 = vpack.c.bf16 %v396, %v393
      %v400 = vpack.c.bf16 %v397, %v394
      %404 = vrot.lane.b32.xlu0 %v398, 127
      %v405 = vpop.permute.xlu0 %404
      %406 = vrot.lane.b32.xlu0 %v399, 127
      %v407 = vpop.permute.xlu0 %406
      %408 = vrot.lane.b32.xlu0 %v400, 127
      %v409 = vpop.permute.xlu0 %408
      %vm410 = vcmask 1039360
      %v411 = vsel %vm410, %v405, %v407
      %v412 = vsel %vm410, %v407, %v409
      %416 = vrot.lane.b32.xlu0 %v398, 126
      %v417 = vpop.permute.xlu0 %416
      %418 = vrot.lane.b32.xlu0 %v399, 126
      %v419 = vpop.permute.xlu0 %418
      %420 = vrot.lane.b32.xlu0 %v400, 126
      %v421 = vpop.permute.xlu0 %420
      %vm422 = vcmask 1031168
      %v423 = vsel %vm422, %v417, %v419
      %v424 = vsel %vm422, %v419, %v421
      %428 = vrot.lane.b32.xlu0 %v398, 110
      %v429 = vpop.permute.xlu0 %428
      %430 = vrot.lane.b32.xlu0 %v399, 110
      %v431 = vpop.permute.xlu0 %430
      %432 = vrot.lane.b32.xlu0 %v400, 110
      %v433 = vpop.permute.xlu0 %432
      %vm434 = vcmask 900096
      %v435 = vsel %vm434, %v429, %v431
      %v436 = vsel %vm434, %v431, %v433
      %440 = vrot.lane.b32.xlu0 %v398, 109
      %v441 = vpop.permute.xlu0 %440
      %442 = vrot.lane.b32.xlu0 %v399, 109
      %v443 = vpop.permute.xlu0 %442
      %444 = vrot.lane.b32.xlu0 %v400, 109
      %v445 = vpop.permute.xlu0 %444
      %vm446 = vcmask 891904
      %v447 = vsel %vm446, %v441, %v443
      %v448 = vsel %vm446, %v443, %v445
      %452 = vrot.lane.b32.xlu0 %v398, 108
      %v453 = vpop.permute.xlu0 %452
      %454 = vrot.lane.b32.xlu0 %v399, 108
      %v455 = vpop.permute.xlu0 %454
      %456 = vrot.lane.b32.xlu0 %v400, 108
      %v457 = vpop.permute.xlu0 %456
      %vm458 = vcmask 883712
      %v459 = vsel %vm458, %v453, %v455
      %v460 = vsel %vm458, %v455, %v457
      %464 = vrot.lane.b32.xlu0 %v398, 92
      %v465 = vpop.permute.xlu0 %464
      %466 = vrot.lane.b32.xlu0 %v399, 92
      %v467 = vpop.permute.xlu0 %466
      %468 = vrot.lane.b32.xlu0 %v400, 92
      %v469 = vpop.permute.xlu0 %468
      %vm470 = vcmask 752640
      %v471 = vsel %vm470, %v465, %v467
      %v472 = vsel %vm470, %v467, %v469
      %476 = vrot.lane.b32.xlu0 %v398, 91
      %v477 = vpop.permute.xlu0 %476
      %478 = vrot.lane.b32.xlu0 %v399, 91
      %v479 = vpop.permute.xlu0 %478
      %480 = vrot.lane.b32.xlu0 %v400, 91
      %v481 = vpop.permute.xlu0 %480
      %vm482 = vcmask 744448
      %v483 = vsel %vm482, %v477, %v479
      %v484 = vsel %vm482, %v479, %v481
      %488 = vrot.lane.b32.xlu0 %v398, 90
      %v489 = vpop.permute.xlu0 %488
      %490 = vrot.lane.b32.xlu0 %v399, 90
      %v491 = vpop.permute.xlu0 %490
      %492 = vrot.lane.b32.xlu0 %v400, 90
      %v493 = vpop.permute.xlu0 %492
      %vm494 = vcmask 736256
      %v495 = vsel %vm494, %v489, %v491
      %v496 = vsel %vm494, %v491, %v493
      %v500 = vld [vmem:[%s5] sm:$0xff]
      %v501 = vld [vmem:[%s5 + $0x8] sm:$0xff]
      %v502 = vld [vmem:[%s5 + $0x10] sm:$0xff]
      %v503 = vld [vmem:[%s6] sm:$0xff]
      %v504 = vld [vmem:[%s6 + $0x8] sm:$0xff]
      %v505 = vld [vmem:[%s6 + $0x10] sm:$0xff]
      %507 = vset.pattern.permute.xlu0 0
      %508 = vperm.xlu0 %507, %v503
      %v509 = vpop.permute.xlu0 %508
      %512 = vset.pattern.permute.xlu0 0
      %513 = vperm.xlu0 %512, %v504
      %v514 = vpop.permute.xlu0 %513
      %517 = vset.pattern.permute.xlu0 0
      %518 = vperm.xlu0 %517, %v505
      %v519 = vpop.permute.xlu0 %518
      %v524 = vunpack.c.l.b16 %v500
      %v525 = vunpack.c.h.b16 %v500
      %v526 = vunpack.c.l.b16 %v501
      %v527 = vunpack.c.h.b16 %v501
      %v528 = vunpack.c.l.b16 %v502
      %v529 = vunpack.c.h.b16 %v502
      %v530 = vpack.c.b16 %v526, %v524
      %v531 = vpack.c.b16 %v527, %v525
      %v532 = vpack.c.b16 %v528, %v528
      %v533 = vpack.c.b16 %v529, %v529
      %vm536 = vcmask 130048
      %v538 = vsel %vm536, %v531, 0
      %v541 = vsel %vm536, %v533, 0
      %543 = vmatprep.subr.bf16.mxu0 %v484
      %544 = vmatpush1.bf16.msra.mxu0 %v483
      %545 = vmatprep.subr.bf16.mxu0 %v472
      %546 = vmatpush1.bf16.msra.mxu0 %v471
      %547 = vmatprep.subr.bf16.mxu0 %v460
      %548 = vmatpush1.bf16.msra.mxu0 %v459
      %549 = vmatprep.subr.bf16.mxu0 %v448
      %550 = vmatpush1.bf16.msra.mxu0 %v447
      %551 = vmatprep.subr.bf16.mxu0 %v436
      %552 = vmatpush1.bf16.msra.mxu0 %v435
      %553 = vmatprep.subr.bf16.mxu0 %v424
      %554 = vmatpush1.bf16.msra.mxu0 %v423
      %555 = vmatprep.subr.bf16.mxu0 %v412
      %556 = vmatpush1.bf16.msra.mxu0 %v411
      %557 = vmatprep.subr.bf16.mxu0 %v399
      %558 = vmatpush1.bf16.msra.mxu0 %v398
      %559 = vmatprep.subr.bf16.mxu0 0
      %560 = vmatpush2.bf16.msra.mxu0 0
      %561 = vmatprep.subr.bf16.mxu0 0
      %562 = vmatpush2.bf16.msra.mxu0 0
      %563 = vmatprep.subr.bf16.mxu0 0
      %564 = vmatpush2.bf16.msra.mxu0 0
      %565 = vmatprep.subr.bf16.mxu0 0
      %566 = vmatpush2.bf16.msra.mxu0 0
      %567 = vmatprep.subr.bf16.mxu0 0
      %568 = vmatpush2.bf16.msra.mxu0 0
      %569 = vmatprep.subr.bf16.mxu0 0
      %570 = vmatpush2.bf16.msra.mxu0 0
      %571 = vmatprep.subr.bf16.mxu0 0
      %572 = vmatpush2.bf16.msra.mxu0 0
      %573 = vmatprep.subr.bf16.mxu0 %v496
      %574 = vmatpush2.bf16.msra.mxu0 %v495
      %575 = vmatprep.mubr.bf16.mxu0 %v538
      %576 = vmatmul.mubr.bf16.gmra.mxu0 %v530
      %v577 = vpop.f32.mrf.mxu0
      %v578 = vadd.f32 %v509, %v577
      %v579 = vpop.f32.mrf.mxu0
      %v580 = vadd.f32 %v509, %v579
      %v581 = vpop.f32.mrf.mxu0
      %v582 = vadd.f32 %v514, %v581
      %v583 = vpop.f32.mrf.mxu0
      %v584 = vadd.f32 %v514, %v583
      %585 = vmatprep.mubr.bf16.mxu0 %v541
      %586 = vmatmul.mubr.bf16.gmra.mxu0 %v532
      %v587 = vpop.f32.mrf.mxu0
      %v588 = vadd.f32 %v519, %v587
      %v589 = vpop.f32.mrf.mxu0
      %v590 = vadd.f32 %v519, %v589
      %v591 = vpop.f32.mrf.mxu0
      %v592 = vpop.f32.mrf.mxu0
      %593 = vdwg.mxu0
      %594 = vmatprep.subr.bf16.mxu0 0
      %595 = vmatpush1.bf16.msra.mxu0 %v481
      %596 = vmatprep.subr.bf16.mxu0 0
      %597 = vmatpush1.bf16.msra.mxu0 %v469
      %598 = vmatprep.subr.bf16.mxu0 0
      %599 = vmatpush1.bf16.msra.mxu0 %v457
      %600 = vmatprep.subr.bf16.mxu0 0
      %601 = vmatpush1.bf16.msra.mxu0 %v445
      %602 = vmatprep.subr.bf16.mxu0 0
      %603 = vmatpush1.bf16.msra.mxu0 %v433
      %604 = vmatprep.subr.bf16.mxu0 0
      %605 = vmatpush1.bf16.msra.mxu0 %v421
      %606 = vmatprep.subr.bf16.mxu0 0
      %607 = vmatpush1.bf16.msra.mxu0 %v409
      %608 = vmatprep.subr.bf16.mxu0 0
      %609 = vmatpush1.bf16.msra.mxu0 %v400
      %610 = vmatprep.subr.bf16.mxu0 0
      %611 = vmatpush2.bf16.msra.mxu0 0
      %612 = vmatprep.subr.bf16.mxu0 0
      %613 = vmatpush2.bf16.msra.mxu0 0
      %614 = vmatprep.subr.bf16.mxu0 0
      %615 = vmatpush2.bf16.msra.mxu0 0
      %616 = vmatprep.subr.bf16.mxu0 0
      %617 = vmatpush2.bf16.msra.mxu0 0
      %618 = vmatprep.subr.bf16.mxu0 0
      %619 = vmatpush2.bf16.msra.mxu0 0
      %620 = vmatprep.subr.bf16.mxu0 0
      %621 = vmatpush2.bf16.msra.mxu0 0
      %622 = vmatprep.subr.bf16.mxu0 0
      %623 = vmatpush2.bf16.msra.mxu0 0
      %624 = vmatprep.subr.bf16.mxu0 0
      %625 = vmatpush2.bf16.msra.mxu0 %v493
      %626 = vmatprep.mubr.bf16.mxu0 %v538
      %627 = vmatmul.mubr.bf16.gmra.mxu0 %v530
      %v628 = vpop.f32.mrf.mxu0
      %v629 = vadd.f32 %v509, %v628
      %v630 = vpop.f32.mrf.mxu0
      %v631 = vpop.f32.mrf.mxu0
      %v632 = vadd.f32 %v514, %v631
      %v633 = vpop.f32.mrf.mxu0
      %634 = vmatprep.mubr.bf16.mxu0 %v541
      %635 = vmatmul.mubr.bf16.gmra.mxu0 %v532
      %v636 = vpop.f32.mrf.mxu0
      %v637 = vadd.f32 %v519, %v636
      %v638 = vpop.f32.mrf.mxu0
      %v639 = vpop.f32.mrf.mxu0
      %v640 = vpop.f32.mrf.mxu0
      %641 = vdwg.mxu0
      %v642 = vpack.c.bf16 %v582, %v578
      %v643 = vpack.c.bf16 %v584, %v580
      %v644 = vpack.c.bf16 %v632, %v629
      %v645 = vpack.c.bf16 %v588, %v588
      %v646 = vpack.c.bf16 %v590, %v590
      %v647 = vpack.c.bf16 %v637, %v637
      %v648 = vld [vmem:[%s7] sm:$0xf]
      %v649 = vld [vmem:[%s7 + $0x4] sm:$0xf]
      %v650 = vld [vmem:[%s7 + $0x8] sm:$0xf]
      %v651 = vld [vmem:[%s7 + $0xc] sm:$0xf]
      %v652 = vld [vmem:[%s7 + $0x10] sm:$0x3]
      %v653 = vld [vmem:[%s320] sm:$0xff]
      %v654 = vld [vmem:[%s320 + $0x40] sm:$0xff]
      %v655 = vld [vmem:[%s320 + $0x80] sm:$0xff]
      %v661 = vunpack.c.l.b16 %v648
      %v662 = vunpack.c.l.b16 %v649
      %v663 = vunpack.c.l.b16 %v650
      %v664 = vunpack.c.l.b16 %v651
      %v665 = vunpack.c.l.b16 %v652
      %v666 = vpack.c.b16 %v662, %v661
      %v667 = vpack.c.b16 %v664, %v663
      %v668 = vpack.c.b16 %v665, %v665
      %vm671 = vcmask 293888
      %v673 = vsel %vm671, %v642, 0
      %v676 = vsel %vm671, %v645, 0
      %vm678 = vcmask 1041408
      %v680 = vsel %vm678, %v668, 0
      %682 = vmatprep.subr.bf16.mxu0 0
      %683 = vmatpush1.bf16.msra.mxu0 0
      %684 = vmatprep.subr.bf16.mxu0 0
      %685 = vmatpush1.bf16.msra.mxu0 0
      %686 = vmatprep.subr.bf16.mxu0 0
      %687 = vmatpush1.bf16.msra.mxu0 0
      %688 = vmatprep.subr.bf16.mxu0 0
      %689 = vmatpush1.bf16.msra.mxu0 0
      %690 = vmatprep.subr.bf16.mxu0 0
      %691 = vmatpush1.bf16.msra.mxu0 0
      %692 = vmatprep.subr.bf16.mxu0 0
      %693 = vmatpush1.bf16.msra.mxu0 %v680
      %694 = vmatprep.subr.bf16.mxu0 0
      %695 = vmatpush1.bf16.msra.mxu0 %v667
      %696 = vmatprep.subr.bf16.mxu0 0
      %697 = vmatpush1.bf16.msra.mxu0 %v666
      %698 = vmatprep.subr.bf16.mxu0 0
      %699 = vmatpush2.bf16.msra.mxu0 0
      %700 = vmatprep.subr.bf16.mxu0 0
      %701 = vmatpush2.bf16.msra.mxu0 0
      %702 = vmatprep.subr.bf16.mxu0 0
      %703 = vmatpush2.bf16.msra.mxu0 0
      %704 = vmatprep.subr.bf16.mxu0 0
      %705 = vmatpush2.bf16.msra.mxu0 0
      %706 = vmatprep.subr.bf16.mxu0 0
      %707 = vmatpush2.bf16.msra.mxu0 0
      %708 = vmatprep.subr.bf16.mxu0 0
      %709 = vmatpush2.bf16.msra.mxu0 0
      %710 = vmatprep.subr.bf16.mxu0 0
      %711 = vmatpush2.bf16.msra.mxu0 0
      %712 = vmatprep.subr.bf16.mxu0 0
      %713 = vmatpush2.bf16.msra.mxu0 0
      %714 = vmatprep.mubr.bf16.mxu0 0
      %715 = vmatmul.mubr.bf16.gmra.mxu0 %v673
      %v716 = vpop.f32.mrf.mxu0
      %v717 = vadd.f32 %v653, %v716
      %v718 = vpop.f32.mrf.mxu0
      %v719 = vpop.f32.mrf.mxu0
      %v720 = vadd.f32 %v654, %v719
      %v721 = vpop.f32.mrf.mxu0
      %722 = vmatprep.mubr.bf16.mxu0 0
      %723 = vmatmul.mubr.bf16.gmra.mxu0 %v676
      %v724 = vpop.f32.mrf.mxu0
      %v725 = vadd.f32 %v655, %v724
      %v726 = vpop.f32.mrf.mxu0
      %v727 = vpop.f32.mrf.mxu0
      %v728 = vpop.f32.mrf.mxu0
      %729 = vdwg.mxu0
      %730 = vst [vmem:[%s325] sm:$0xff] %v717
      %731 = vst [vmem:[%s325 + $0x40] sm:$0xff] %v720
      %732 = vst [vmem:[%s325 + $0x80] sm:$0xff] %v725
      %v733 = vld [vmem:[%s7] sm:$0xf]
      %v734 = vld [vmem:[%s7 + $0x4] sm:$0xf]
      %v735 = vld [vmem:[%s7 + $0x8] sm:$0xf]
      %v736 = vld [vmem:[%s7 + $0xc] sm:$0xf]
      %v737 = vld [vmem:[%s7 + $0x10] sm:$0x3]
      %v738 = vld [vmem:[%s320 + $0x8] sm:$0xff]
      %v739 = vld [vmem:[%s320 + $0x48] sm:$0xff]
      %v740 = vld [vmem:[%s320 + $0x88] sm:$0xff]
      %743 = vrot.lane.b32.xlu0 %v642, 92
      %v744 = vpop.permute.xlu0 %743
      %745 = vrot.lane.b32.xlu0 %v645, 92
      %v746 = vpop.permute.xlu0 %745
      %v752 = vunpack.c.l.b16 %v733
      %v753 = vunpack.c.l.b16 %v734
      %v754 = vunpack.c.l.b16 %v735
      %v755 = vunpack.c.l.b16 %v736
      %v756 = vunpack.c.l.b16 %v737
      %v757 = vpack.c.b16 %v753, %v752
      %v758 = vpack.c.b16 %v755, %v754
      %v759 = vpack.c.b16 %v756, %v756
      %v763 = vsel %vm671, %v744, 0
      %v766 = vsel %vm671, %v746, 0
      %v769 = vsel %vm678, %v759, 0
      %771 = vmatprep.subr.bf16.mxu0 0
      %772 = vmatpush1.bf16.msra.mxu0 0
      %773 = vmatprep.subr.bf16.mxu0 0
      %774 = vmatpush1.bf16.msra.mxu0 0
      %775 = vmatprep.subr.bf16.mxu0 0
      %776 = vmatpush1.bf16.msra.mxu0 0
      %777 = vmatprep.subr.bf16.mxu0 0
      %778 = vmatpush1.bf16.msra.mxu0 0
      %779 = vmatprep.subr.bf16.mxu0 0
      %780 = vmatpush1.bf16.msra.mxu0 0
      %781 = vmatprep.subr.bf16.mxu0 0
      %782 = vmatpush1.bf16.msra.mxu0 %v769
      %783 = vmatprep.subr.bf16.mxu0 0
      %784 = vmatpush1.bf16.msra.mxu0 %v758
      %785 = vmatprep.subr.bf16.mxu0 0
      %786 = vmatpush1.bf16.msra.mxu0 %v757
      %787 = vmatprep.subr.bf16.mxu0 0
      %788 = vmatpush2.bf16.msra.mxu0 0
      %789 = vmatprep.subr.bf16.mxu0 0
      %790 = vmatpush2.bf16.msra.mxu0 0
      %791 = vmatprep.subr.bf16.mxu0 0
      %792 = vmatpush2.bf16.msra.mxu0 0
      %793 = vmatprep.subr.bf16.mxu0 0
      %794 = vmatpush2.bf16.msra.mxu0 0
      %795 = vmatprep.subr.bf16.mxu0 0
      %796 = vmatpush2.bf16.msra.mxu0 0
      %797 = vmatprep.subr.bf16.mxu0 0
      %798 = vmatpush2.bf16.msra.mxu0 0
      %799 = vmatprep.subr.bf16.mxu0 0
      %800 = vmatpush2.bf16.msra.mxu0 0
      %801 = vmatprep.subr.bf16.mxu0 0
      %802 = vmatpush2.bf16.msra.mxu0 0
      %803 = vmatprep.mubr.bf16.mxu0 0
      %804 = vmatmul.mubr.bf16.gmra.mxu0 %v763
      %v805 = vpop.f32.mrf.mxu0
      %v806 = vadd.f32 %v738, %v805
      %v807 = vpop.f32.mrf.mxu0
      %v808 = vpop.f32.mrf.mxu0
      %v809 = vadd.f32 %v739, %v808
      %v810 = vpop.f32.mrf.mxu0
      %811 = vmatprep.mubr.bf16.mxu0 0
      %812 = vmatmul.mubr.bf16.gmra.mxu0 %v766
      %v813 = vpop.f32.mrf.mxu0
      %v814 = vadd.f32 %v740, %v813
      %v815 = vpop.f32.mrf.mxu0
      %v816 = vpop.f32.mrf.mxu0
      %v817 = vpop.f32.mrf.mxu0
      %818 = vdwg.mxu0
      %819 = vst [vmem:[%s325 + $0x8] sm:$0xff] %v806
      %820 = vst [vmem:[%s325 + $0x48] sm:$0xff] %v809
      %821 = vst [vmem:[%s325 + $0x88] sm:$0xff] %v814
      %v822 = vld [vmem:[%s7] sm:$0xf]
      %v823 = vld [vmem:[%s7 + $0x4] sm:$0xf]
      %v824 = vld [vmem:[%s7 + $0x8] sm:$0xf]
      %v825 = vld [vmem:[%s7 + $0xc] sm:$0xf]
      %v826 = vld [vmem:[%s7 + $0x10] sm:$0x3]
      %v827 = vld [vmem:[%s320 + $0x10] sm:$0xff]
      %v828 = vld [vmem:[%s320 + $0x50] sm:$0xff]
      %v829 = vld [vmem:[%s320 + $0x90] sm:$0xff]
      %830 = vrot.lane.b32.xlu0 %v642, 56
      %v831 = vpop.permute.xlu0 %830
      %832 = vrot.lane.b32.xlu0 %v645, 56
      %v833 = vpop.permute.xlu0 %832
      %v839 = vunpack.c.l.b16 %v822
      %v840 = vunpack.c.l.b16 %v823
      %v841 = vunpack.c.l.b16 %v824
      %v842 = vunpack.c.l.b16 %v825
      %v843 = vunpack.c.l.b16 %v826
      %v844 = vpack.c.b16 %v840, %v839
      %v845 = vpack.c.b16 %v842, %v841
      %v846 = vpack.c.b16 %v843, %v843
      %v850 = vsel %vm671, %v831, 0
      %v853 = vsel %vm671, %v833, 0
      %v856 = vsel %vm678, %v846, 0
      %858 = vmatprep.subr.bf16.mxu0 0
      %859 = vmatpush1.bf16.msra.mxu0 0
      %860 = vmatprep.subr.bf16.mxu0 0
      %861 = vmatpush1.bf16.msra.mxu0 0
      %862 = vmatprep.subr.bf16.mxu0 0
      %863 = vmatpush1.bf16.msra.mxu0 0
      %864 = vmatprep.subr.bf16.mxu0 0
      %865 = vmatpush1.bf16.msra.mxu0 0
      %866 = vmatprep.subr.bf16.mxu0 0
      %867 = vmatpush1.bf16.msra.mxu0 0
      %868 = vmatprep.subr.bf16.mxu0 0
      %869 = vmatpush1.bf16.msra.mxu0 %v856
      %870 = vmatprep.subr.bf16.mxu0 0
      %871 = vmatpush1.bf16.msra.mxu0 %v845
      %872 = vmatprep.subr.bf16.mxu0 0
      %873 = vmatpush1.bf16.msra.mxu0 %v844
      %874 = vmatprep.subr.bf16.mxu0 0
      %875 = vmatpush2.bf16.msra.mxu0 0
      %876 = vmatprep.subr.bf16.mxu0 0
      %877 = vmatpush2.bf16.msra.mxu0 0
      %878 = vmatprep.subr.bf16.mxu0 0
      %879 = vmatpush2.bf16.msra.mxu0 0
      %880 = vmatprep.subr.bf16.mxu0 0
      %881 = vmatpush2.bf16.msra.mxu0 0
      %882 = vmatprep.subr.bf16.mxu0 0
      %883 = vmatpush2.bf16.msra.mxu0 0
      %884 = vmatprep.subr.bf16.mxu0 0
      %885 = vmatpush2.bf16.msra.mxu0 0
      %886 = vmatprep.subr.bf16.mxu0 0
      %887 = vmatpush2.bf16.msra.mxu0 0
      %888 = vmatprep.subr.bf16.mxu0 0
      %889 = vmatpush2.bf16.msra.mxu0 0
      %890 = vmatprep.mubr.bf16.mxu0 0
      %891 = vmatmul.mubr.bf16.gmra.mxu0 %v850
      %v892 = vpop.f32.mrf.mxu0
      %v893 = vadd.f32 %v827, %v892
      %v894 = vpop.f32.mrf.mxu0
      %v895 = vpop.f32.mrf.mxu0
      %v896 = vadd.f32 %v828, %v895
      %v897 = vpop.f32.mrf.mxu0
      %898 = vmatprep.mubr.bf16.mxu0 0
      %899 = vmatmul.mubr.bf16.gmra.mxu0 %v853
      %v900 = vpop.f32.mrf.mxu0
      %v901 = vadd.f32 %v829, %v900
      %v902 = vpop.f32.mrf.mxu0
      %v903 = vpop.f32.mrf.mxu0
      %v904 = vpop.f32.mrf.mxu0
      %905 = vdwg.mxu0
      %906 = vst [vmem:[%s325 + $0x10] sm:$0xff] %v893
      %907 = vst [vmem:[%s325 + $0x50] sm:$0xff] %v896
      %908 = vst [vmem:[%s325 + $0x90] sm:$0xff] %v901
      %v909 = vld [vmem:[%s7] sm:$0xf]
      %v910 = vld [vmem:[%s7 + $0x4] sm:$0xf]
      %v911 = vld [vmem:[%s7 + $0x8] sm:$0xf]
      %v912 = vld [vmem:[%s7 + $0xc] sm:$0xf]
      %v913 = vld [vmem:[%s7 + $0x10] sm:$0x3]
      %v914 = vld [vmem:[%s320 + $0x18] sm:$0xff]
      %v915 = vld [vmem:[%s320 + $0x58] sm:$0xff]
      %v916 = vld [vmem:[%s320 + $0x98] sm:$0xff]
      %919 = vrot.lane.b32.xlu0 %v642, 20
      %v920 = vpop.permute.xlu0 %919
      %921 = vrot.lane.b32.xlu0 %v643, 20
      %v922 = vpop.permute.xlu0 %921
      %923 = vrot.lane.b32.xlu0 %v645, 20
      %v924 = vpop.permute.xlu0 %923
      %925 = vrot.lane.b32.xlu0 %v646, 20
      %v926 = vpop.permute.xlu0 %925
      %vm927 = vcmask 162816
      %v928 = vsel %vm927, %v920, %v922
      %v929 = vsel %vm927, %v924, %v926
      %v935 = vunpack.c.l.b16 %v909
      %v936 = vunpack.c.l.b16 %v910
      %v937 = vunpack.c.l.b16 %v911
      %v938 = vunpack.c.l.b16 %v912
      %v939 = vunpack.c.l.b16 %v913
      %v940 = vpack.c.b16 %v936, %v935
      %v941 = vpack.c.b16 %v938, %v937
      %v942 = vpack.c.b16 %v939, %v939
      %v946 = vsel %vm671, %v928, 0
      %v949 = vsel %vm671, %v929, 0
      %v952 = vsel %vm678, %v942, 0
      %954 = vmatprep.subr.bf16.mxu0 0
      %955 = vmatpush1.bf16.msra.mxu0 0
      %956 = vmatprep.subr.bf16.mxu0 0
      %957 = vmatpush1.bf16.msra.mxu0 0
      %958 = vmatprep.subr.bf16.mxu0 0
      %959 = vmatpush1.bf16.msra.mxu0 0
      %960 = vmatprep.subr.bf16.mxu0 0
      %961 = vmatpush1.bf16.msra.mxu0 0
      %962 = vmatprep.subr.bf16.mxu0 0
      %963 = vmatpush1.bf16.msra.mxu0 0
      %964 = vmatprep.subr.bf16.mxu0 0
      %965 = vmatpush1.bf16.msra.mxu0 %v952
      %966 = vmatprep.subr.bf16.mxu0 0
      %967 = vmatpush1.bf16.msra.mxu0 %v941
      %968 = vmatprep.subr.bf16.mxu0 0
      %969 = vmatpush1.bf16.msra.mxu0 %v940
      %970 = vmatprep.subr.bf16.mxu0 0
      %971 = vmatpush2.bf16.msra.mxu0 0
      %972 = vmatprep.subr.bf16.mxu0 0
      %973 = vmatpush2.bf16.msra.mxu0 0
      %974 = vmatprep.subr.bf16.mxu0 0
      %975 = vmatpush2.bf16.msra.mxu0 0
      %976 = vmatprep.subr.bf16.mxu0 0
      %977 = vmatpush2.bf16.msra.mxu0 0
      %978 = vmatprep.subr.bf16.mxu0 0
      %979 = vmatpush2.bf16.msra.mxu0 0
      %980 = vmatprep.subr.bf16.mxu0 0
      %981 = vmatpush2.bf16.msra.mxu0 0
      %982 = vmatprep.subr.bf16.mxu0 0
      %983 = vmatpush2.bf16.msra.mxu0 0
      %984 = vmatprep.subr.bf16.mxu0 0
      %985 = vmatpush2.bf16.msra.mxu0 0
      %986 = vmatprep.mubr.bf16.mxu0 0
      %987 = vmatmul.mubr.bf16.gmra.mxu0 %v946
      %v988 = vpop.f32.mrf.mxu0
      %v989 = vadd.f32 %v914, %v988
      %v990 = vpop.f32.mrf.mxu0
      %v991 = vpop.f32.mrf.mxu0
      %v992 = vadd.f32 %v915, %v991
      %v993 = vpop.f32.mrf.mxu0
      %994 = vmatprep.mubr.bf16.mxu0 0
      %995 = vmatmul.mubr.bf16.gmra.mxu0 %v949
      %v996 = vpop.f32.mrf.mxu0
      %v997 = vadd.f32 %v916, %v996
      %v998 = vpop.f32.mrf.mxu0
      %v999 = vpop.f32.mrf.mxu0
      %v1000 = vpop.f32.mrf.mxu0
      %1001 = vdwg.mxu0
      %1002 = vst [vmem:[%s325 + $0x18] sm:$0xff] %v989
      %1003 = vst [vmem:[%s325 + $0x58] sm:$0xff] %v992
      %1004 = vst [vmem:[%s325 + $0x98] sm:$0xff] %v997
      %v1005 = vld [vmem:[%s7] sm:$0xf]
      %v1006 = vld [vmem:[%s7 + $0x4] sm:$0xf]
      %v1007 = vld [vmem:[%s7 + $0x8] sm:$0xf]
      %v1008 = vld [vmem:[%s7 + $0xc] sm:$0xf]
      %v1009 = vld [vmem:[%s7 + $0x10] sm:$0x3]
      %v1010 = vld [vmem:[%s320 + $0x20] sm:$0xff]
      %v1011 = vld [vmem:[%s320 + $0x60] sm:$0xff]
      %v1012 = vld [vmem:[%s320 + $0xa0] sm:$0xff]
      %1013 = vrot.lane.b32.xlu0 %v643, 112
      %v1014 = vpop.permute.xlu0 %1013
      %1015 = vrot.lane.b32.xlu0 %v646, 112
      %v1016 = vpop.permute.xlu0 %1015
      %v1022 = vunpack.c.l.b16 %v1005
      %v1023 = vunpack.c.l.b16 %v1006
      %v1024 = vunpack.c.l.b16 %v1007
      %v1025 = vunpack.c.l.b16 %v1008
      %v1026 = vunpack.c.l.b16 %v1009
      %v1027 = vpack.c.b16 %v1023, %v1022
      %v1028 = vpack.c.b16 %v1025, %v1024
      %v1029 = vpack.c.b16 %v1026, %v1026
      %v1033 = vsel %vm671, %v1014, 0
      %v1036 = vsel %vm671, %v1016, 0
      %v1039 = vsel %vm678, %v1029, 0
      %1041 = vmatprep.subr.bf16.mxu0 0
      %1042 = vmatpush1.bf16.msra.mxu0 0
      %1043 = vmatprep.subr.bf16.mxu0 0
      %1044 = vmatpush1.bf16.msra.mxu0 0
      %1045 = vmatprep.subr.bf16.mxu0 0
      %1046 = vmatpush1.bf16.msra.mxu0 0
      %1047 = vmatprep.subr.bf16.mxu0 0
      %1048 = vmatpush1.bf16.msra.mxu0 0
      %1049 = vmatprep.subr.bf16.mxu0 0
      %1050 = vmatpush1.bf16.msra.mxu0 0
      %1051 = vmatprep.subr.bf16.mxu0 0
      %1052 = vmatpush1.bf16.msra.mxu0 %v1039
      %1053 = vmatprep.subr.bf16.mxu0 0
      %1054 = vmatpush1.bf16.msra.mxu0 %v1028
      %1055 = vmatprep.subr.bf16.mxu0 0
      %1056 = vmatpush1.bf16.msra.mxu0 %v1027
      %1057 = vmatprep.subr.bf16.mxu0 0
      %1058 = vmatpush2.bf16.msra.mxu0 0
      %1059 = vmatprep.subr.bf16.mxu0 0
      %1060 = vmatpush2.bf16.msra.mxu0 0
      %1061 = vmatprep.subr.bf16.mxu0 0
      %1062 = vmatpush2.bf16.msra.mxu0 0
      %1063 = vmatprep.subr.bf16.mxu0 0
      %1064 = vmatpush2.bf16.msra.mxu0 0
      %1065 = vmatprep.subr.bf16.mxu0 0
      %1066 = vmatpush2.bf16.msra.mxu0 0
      %1067 = vmatprep.subr.bf16.mxu0 0
      %1068 = vmatpush2.bf16.msra.mxu0 0
      %1069 = vmatprep.subr.bf16.mxu0 0
      %1070 = vmatpush2.bf16.msra.mxu0 0
      %1071 = vmatprep.subr.bf16.mxu0 0
      %1072 = vmatpush2.bf16.msra.mxu0 0
      %1073 = vmatprep.mubr.bf16.mxu0 0
      %1074 = vmatmul.mubr.bf16.gmra.mxu0 %v1033
      %v1075 = vpop.f32.mrf.mxu0
      %v1076 = vadd.f32 %v1010, %v1075
      %v1077 = vpop.f32.mrf.mxu0
      %v1078 = vpop.f32.mrf.mxu0
      %v1079 = vadd.f32 %v1011, %v1078
      %v1080 = vpop.f32.mrf.mxu0
      %1081 = vmatprep.mubr.bf16.mxu0 0
      %1082 = vmatmul.mubr.bf16.gmra.mxu0 %v1036
      %v1083 = vpop.f32.mrf.mxu0
      %v1084 = vadd.f32 %v1012, %v1083
      %v1085 = vpop.f32.mrf.mxu0
      %v1086 = vpop.f32.mrf.mxu0
      %v1087 = vpop.f32.mrf.mxu0
      %1088 = vdwg.mxu0
      %1089 = vst [vmem:[%s325 + $0x20] sm:$0xff] %v1076
      %1090 = vst [vmem:[%s325 + $0x60] sm:$0xff] %v1079
      %1091 = vst [vmem:[%s325 + $0xa0] sm:$0xff] %v1084
      %v1092 = vld [vmem:[%s7] sm:$0xf]
      %v1093 = vld [vmem:[%s7 + $0x4] sm:$0xf]
      %v1094 = vld [vmem:[%s7 + $0x8] sm:$0xf]
      %v1095 = vld [vmem:[%s7 + $0xc] sm:$0xf]
      %v1096 = vld [vmem:[%s7 + $0x10] sm:$0x3]
      %v1097 = vld [vmem:[%s320 + $0x28] sm:$0xff]
      %v1098 = vld [vmem:[%s320 + $0x68] sm:$0xff]
      %v1099 = vld [vmem:[%s320 + $0xa8] sm:$0xff]
      %1100 = vrot.lane.b32.xlu0 %v643, 76
      %v1101 = vpop.permute.xlu0 %1100
      %1102 = vrot.lane.b32.xlu0 %v646, 76
      %v1103 = vpop.permute.xlu0 %1102
      %v1109 = vunpack.c.l.b16 %v1092
      %v1110 = vunpack.c.l.b16 %v1093
      %v1111 = vunpack.c.l.b16 %v1094
      %v1112 = vunpack.c.l.b16 %v1095
      %v1113 = vunpack.c.l.b16 %v1096
      %v1114 = vpack.c.b16 %v1110, %v1109
      %v1115 = vpack.c.b16 %v1112, %v1111
      %v1116 = vpack.c.b16 %v1113, %v1113
      %v1120 = vsel %vm671, %v1101, 0
      %v1123 = vsel %vm671, %v1103, 0
      %v1126 = vsel %vm678, %v1116, 0
      %1128 = vmatprep.subr.bf16.mxu0 0
      %1129 = vmatpush1.bf16.msra.mxu0 0
      %1130 = vmatprep.subr.bf16.mxu0 0
      %1131 = vmatpush1.bf16.msra.mxu0 0
      %1132 = vmatprep.subr.bf16.mxu0 0
      %1133 = vmatpush1.bf16.msra.mxu0 0
      %1134 = vmatprep.subr.bf16.mxu0 0
      %1135 = vmatpush1.bf16.msra.mxu0 0
      %1136 = vmatprep.subr.bf16.mxu0 0
      %1137 = vmatpush1.bf16.msra.mxu0 0
      %1138 = vmatprep.subr.bf16.mxu0 0
      %1139 = vmatpush1.bf16.msra.mxu0 %v1126
      %1140 = vmatprep.subr.bf16.mxu0 0
      %1141 = vmatpush1.bf16.msra.mxu0 %v1115
      %1142 = vmatprep.subr.bf16.mxu0 0
      %1143 = vmatpush1.bf16.msra.mxu0 %v1114
      %1144 = vmatprep.subr.bf16.mxu0 0
      %1145 = vmatpush2.bf16.msra.mxu0 0
      %1146 = vmatprep.subr.bf16.mxu0 0
      %1147 = vmatpush2.bf16.msra.mxu0 0
      %1148 = vmatprep.subr.bf16.mxu0 0
      %1149 = vmatpush2.bf16.msra.mxu0 0
      %1150 = vmatprep.subr.bf16.mxu0 0
      %1151 = vmatpush2.bf16.msra.mxu0 0
      %1152 = vmatprep.subr.bf16.mxu0 0
      %1153 = vmatpush2.bf16.msra.mxu0 0
      %1154 = vmatprep.subr.bf16.mxu0 0
      %1155 = vmatpush2.bf16.msra.mxu0 0
      %1156 = vmatprep.subr.bf16.mxu0 0
      %1157 = vmatpush2.bf16.msra.mxu0 0
      %1158 = vmatprep.subr.bf16.mxu0 0
      %1159 = vmatpush2.bf16.msra.mxu0 0
      %1160 = vmatprep.mubr.bf16.mxu0 0
      %1161 = vmatmul.mubr.bf16.gmra.mxu0 %v1120
      %v1162 = vpop.f32.mrf.mxu0
      %v1163 = vadd.f32 %v1097, %v1162
      %v1164 = vpop.f32.mrf.mxu0
      %v1165 = vpop.f32.mrf.mxu0
      %v1166 = vadd.f32 %v1098, %v1165
      %v1167 = vpop.f32.mrf.mxu0
      %1168 = vmatprep.mubr.bf16.mxu0 0
      %1169 = vmatmul.mubr.bf16.gmra.mxu0 %v1123
      %v1170 = vpop.f32.mrf.mxu0
      %v1171 = vadd.f32 %v1099, %v1170
      %v1172 = vpop.f32.mrf.mxu0
      %v1173 = vpop.f32.mrf.mxu0
      %v1174 = vpop.f32.mrf.mxu0
      %1175 = vdwg.mxu0
      %1176 = vst [vmem:[%s325 + $0x28] sm:$0xff] %v1163
      %1177 = vst [vmem:[%s325 + $0x68] sm:$0xff] %v1166
      %1178 = vst [vmem:[%s325 + $0xa8] sm:$0xff] %v1171
      %v1179 = vld [vmem:[%s7] sm:$0xf]
      %v1180 = vld [vmem:[%s7 + $0x4] sm:$0xf]
      %v1181 = vld [vmem:[%s7 + $0x8] sm:$0xf]
      %v1182 = vld [vmem:[%s7 + $0xc] sm:$0xf]
      %v1183 = vld [vmem:[%s7 + $0x10] sm:$0x3]
      %v1184 = vld [vmem:[%s320 + $0x30] sm:$0xff]
      %v1185 = vld [vmem:[%s320 + $0x70] sm:$0xff]
      %v1186 = vld [vmem:[%s320 + $0xb0] sm:$0xff]
      %1187 = vrot.lane.b32.xlu0 %v643, 40
      %v1188 = vpop.permute.xlu0 %1187
      %1189 = vrot.lane.b32.xlu0 %v646, 40
      %v1190 = vpop.permute.xlu0 %1189
      %v1196 = vunpack.c.l.b16 %v1179
      %v1197 = vunpack.c.l.b16 %v1180
      %v1198 = vunpack.c.l.b16 %v1181
      %v1199 = vunpack.c.l.b16 %v1182
      %v1200 = vunpack.c.l.b16 %v1183
      %v1201 = vpack.c.b16 %v1197, %v1196
      %v1202 = vpack.c.b16 %v1199, %v1198
      %v1203 = vpack.c.b16 %v1200, %v1200
      %v1207 = vsel %vm671, %v1188, 0
      %v1210 = vsel %vm671, %v1190, 0
      %v1213 = vsel %vm678, %v1203, 0
      %1215 = vmatprep.subr.bf16.mxu0 0
      %1216 = vmatpush1.bf16.msra.mxu0 0
      %1217 = vmatprep.subr.bf16.mxu0 0
      %1218 = vmatpush1.bf16.msra.mxu0 0
      %1219 = vmatprep.subr.bf16.mxu0 0
      %1220 = vmatpush1.bf16.msra.mxu0 0
      %1221 = vmatprep.subr.bf16.mxu0 0
      %1222 = vmatpush1.bf16.msra.mxu0 0
      %1223 = vmatprep.subr.bf16.mxu0 0
      %1224 = vmatpush1.bf16.msra.mxu0 0
      %1225 = vmatprep.subr.bf16.mxu0 0
      %1226 = vmatpush1.bf16.msra.mxu0 %v1213
      %1227 = vmatprep.subr.bf16.mxu0 0
      %1228 = vmatpush1.bf16.msra.mxu0 %v1202
      %1229 = vmatprep.subr.bf16.mxu0 0
      %1230 = vmatpush1.bf16.msra.mxu0 %v1201
      %1231 = vmatprep.subr.bf16.mxu0 0
      %1232 = vmatpush2.bf16.msra.mxu0 0
      %1233 = vmatprep.subr.bf16.mxu0 0
      %1234 = vmatpush2.bf16.msra.mxu0 0
      %1235 = vmatprep.subr.bf16.mxu0 0
      %1236 = vmatpush2.bf16.msra.mxu0 0
      %1237 = vmatprep.subr.bf16.mxu0 0
      %1238 = vmatpush2.bf16.msra.mxu0 0
      %1239 = vmatprep.subr.bf16.mxu0 0
      %1240 = vmatpush2.bf16.msra.mxu0 0
      %1241 = vmatprep.subr.bf16.mxu0 0
      %1242 = vmatpush2.bf16.msra.mxu0 0
      %1243 = vmatprep.subr.bf16.mxu0 0
      %1244 = vmatpush2.bf16.msra.mxu0 0
      %1245 = vmatprep.subr.bf16.mxu0 0
      %1246 = vmatpush2.bf16.msra.mxu0 0
      %1247 = vmatprep.mubr.bf16.mxu0 0
      %1248 = vmatmul.mubr.bf16.gmra.mxu0 %v1207
      %v1249 = vpop.f32.mrf.mxu0
      %v1250 = vadd.f32 %v1184, %v1249
      %v1251 = vpop.f32.mrf.mxu0
      %v1252 = vpop.f32.mrf.mxu0
      %v1253 = vadd.f32 %v1185, %v1252
      %v1254 = vpop.f32.mrf.mxu0
      %1255 = vmatprep.mubr.bf16.mxu0 0
      %1256 = vmatmul.mubr.bf16.gmra.mxu0 %v1210
      %v1257 = vpop.f32.mrf.mxu0
      %v1258 = vadd.f32 %v1186, %v1257
      %v1259 = vpop.f32.mrf.mxu0
      %v1260 = vpop.f32.mrf.mxu0
      %v1261 = vpop.f32.mrf.mxu0
      %1262 = vdwg.mxu0
      %1263 = vst [vmem:[%s325 + $0x30] sm:$0xff] %v1250
      %1264 = vst [vmem:[%s325 + $0x70] sm:$0xff] %v1253
      %1265 = vst [vmem:[%s325 + $0xb0] sm:$0xff] %v1258
      %v1266 = vld [vmem:[%s7] sm:$0xf]
      %v1267 = vld [vmem:[%s7 + $0x4] sm:$0xf]
      %v1268 = vld [vmem:[%s7 + $0x8] sm:$0xf]
      %v1269 = vld [vmem:[%s7 + $0xc] sm:$0xf]
      %v1270 = vld [vmem:[%s7 + $0x10] sm:$0x3]
      %v1271 = vld [vmem:[%s320 + $0x38] sm:$0xff]
      %v1272 = vld [vmem:[%s320 + $0x78] sm:$0xff]
      %v1273 = vld [vmem:[%s320 + $0xb8] sm:$0xff]
      %1276 = vrot.lane.b32.xlu0 %v643, 4
      %v1277 = vpop.permute.xlu0 %1276
      %1278 = vrot.lane.b32.xlu0 %v644, 4
      %v1279 = vpop.permute.xlu0 %1278
      %1280 = vrot.lane.b32.xlu0 %v646, 4
      %v1281 = vpop.permute.xlu0 %1280
      %1282 = vrot.lane.b32.xlu0 %v647, 4
      %v1283 = vpop.permute.xlu0 %1282
      %vm1284 = vcmask 31744
      %v1285 = vsel %vm1284, %v1277, %v1279
      %v1286 = vsel %vm1284, %v1281, %v1283
      %v1292 = vunpack.c.l.b16 %v1266
      %v1293 = vunpack.c.l.b16 %v1267
      %v1294 = vunpack.c.l.b16 %v1268
      %v1295 = vunpack.c.l.b16 %v1269
      %v1296 = vunpack.c.l.b16 %v1270
      %v1297 = vpack.c.b16 %v1293, %v1292
      %v1298 = vpack.c.b16 %v1295, %v1294
      %v1299 = vpack.c.b16 %v1296, %v1296
      %v1303 = vsel %vm671, %v1285, 0
      %v1306 = vsel %vm671, %v1286, 0
      %v1309 = vsel %vm678, %v1299, 0
      %1311 = vmatprep.subr.bf16.mxu0 0
      %1312 = vmatpush1.bf16.msra.mxu0 0
      %1313 = vmatprep.subr.bf16.mxu0 0
      %1314 = vmatpush1.bf16.msra.mxu0 0
      %1315 = vmatprep.subr.bf16.mxu0 0
      %1316 = vmatpush1.bf16.msra.mxu0 0
      %1317 = vmatprep.subr.bf16.mxu0 0
      %1318 = vmatpush1.bf16.msra.mxu0 0
      %1319 = vmatprep.subr.bf16.mxu0 0
      %1320 = vmatpush1.bf16.msra.mxu0 0
      %1321 = vmatprep.subr.bf16.mxu0 0
      %1322 = vmatpush1.bf16.msra.mxu0 %v1309
      %1323 = vmatprep.subr.bf16.mxu0 0
      %1324 = vmatpush1.bf16.msra.mxu0 %v1298
      %1325 = vmatprep.subr.bf16.mxu0 0
      %1326 = vmatpush1.bf16.msra.mxu0 %v1297
      %1327 = vmatprep.subr.bf16.mxu0 0
      %1328 = vmatpush2.bf16.msra.mxu0 0
      %1329 = vmatprep.subr.bf16.mxu0 0
      %1330 = vmatpush2.bf16.msra.mxu0 0
      %1331 = vmatprep.subr.bf16.mxu0 0
      %1332 = vmatpush2.bf16.msra.mxu0 0
      %1333 = vmatprep.subr.bf16.mxu0 0
      %1334 = vmatpush2.bf16.msra.mxu0 0
      %1335 = vmatprep.subr.bf16.mxu0 0
      %1336 = vmatpush2.bf16.msra.mxu0 0
      %1337 = vmatprep.subr.bf16.mxu0 0
      %1338 = vmatpush2.bf16.msra.mxu0 0
      %1339 = vmatprep.subr.bf16.mxu0 0
      %1340 = vmatpush2.bf16.msra.mxu0 0
      %1341 = vmatprep.subr.bf16.mxu0 0
      %1342 = vmatpush2.bf16.msra.mxu0 0
      %1343 = vmatprep.mubr.bf16.mxu0 0
      %1344 = vmatmul.mubr.bf16.gmra.mxu0 %v1303
      %v1345 = vpop.f32.mrf.mxu0
      %v1346 = vadd.f32 %v1271, %v1345
      %v1347 = vpop.f32.mrf.mxu0
      %v1348 = vpop.f32.mrf.mxu0
      %v1349 = vadd.f32 %v1272, %v1348
      %v1350 = vpop.f32.mrf.mxu0
      %1351 = vmatprep.mubr.bf16.mxu0 0
      %1352 = vmatmul.mubr.bf16.gmra.mxu0 %v1306
      %v1353 = vpop.f32.mrf.mxu0
      %v1354 = vadd.f32 %v1273, %v1353
      %v1355 = vpop.f32.mrf.mxu0
      %v1356 = vpop.f32.mrf.mxu0
      %v1357 = vpop.f32.mrf.mxu0
      %1358 = vdwg.mxu0
      %1359 = vst [vmem:[%s325 + $0x38] sm:$0xff] %v1346
      %1360 = vst [vmem:[%s325 + $0x78] sm:$0xff] %v1349
      %1361 = vst [vmem:[%s325 + $0xb8] sm:$0xff] %v1354
      %p1362 = scmp.lt.s32.totalorder %s19, 1
      %s1363 = scalar_select %p1362, %s19, 1
      %s1364 = smul.addr %s1363, 24
      %s1365 = smul.addr %s1364, 8
      %s1366 = scalar_lea.vmem %s8, %s1365
      // Predicated region
      $region53: #{hourglass2d_up_forward.1} parent=51 // pred_check
        %p1367 = pneg %p215
      $region54: #{hourglass2d_up_forward.1} parent=51 // pred_check_branch
        %1369 = sbr.rel (%p1367) target = $region56
      $region55: #{hourglass2d_up_forward.1} parent=51 // pred_region
        _
      $region56: #{hourglass2d_up_forward.1} parent=51 // pred_fallthru
        _
    $region52: #{hourglass2d_up_forward.1} parent=5 // pred_fallthru
      _
    %p1370 = scmp.le.s32.totalorder 2, %s14
    // Predicated region
    $region57: #{hourglass2d_up_forward.1} parent=5 // pred_check
      %p1371 = pneg %p1370
    $region58: #{hourglass2d_up_forward.1} parent=5 // pred_check_branch
      %1373 = sbr.rel (%p1371) target = $region60
    $region59: #{hourglass2d_up_forward.1} parent=5 // pred_region
      %s1374 = ssub.s32 %s14, 2
      // Predicated region
      $region61: #{hourglass2d_up_forward.1} parent=59 // pred_check
        %p1375 = pneg %p221
      $region62: #{hourglass2d_up_forward.1} parent=59 // pred_check_branch
        %1377 = sbr.rel (%p1375) target = $region64
      $region63: #{hourglass2d_up_forward.1} parent=59 // pred_region
        %p1378 = scmp.lt.s32.totalorder %s20, 1
        %s1379 = scalar_select %p1378, %s20, 1
        %s1380 = smul.addr %s1379, 24
        %s1381 = smul.addr %s1380, 8
        %s1382 = scalar_lea.vmem %s8, %s1381
      $region64: #{hourglass2d_up_forward.1} parent=59 // pred_fallthru
        _
    $region60: #{hourglass2d_up_forward.1} parent=5 // pred_fallthru
      _
  $region6: #{hourglass2d_up_forward.1} parent=0 // loop_footer
    %s18 = sadd.s32 1, %s14
  $region7: #{hourglass2d_up_forward.1} parent=0 // loop_footer_branch
    %13 = sbr.rel target = $region3
  $region8: #{hourglass2d_up_forward.1} parent=0 // loop_exit
    _

</llo_original>
